<compile_context>
chip_gen: v7x
topology: tpu7x:2x2x1
jax: 0.10.0
libtpu: 0.0.40
codegen_flags: <defaults>
</compile_context>

<pallas_src>
import jax
import jax.numpy as jnp
from jax import lax
from jax.experimental import pallas as pl
from jax.experimental.pallas import tpu as pltpu


def _make_lstm_kernel(S, B, H):
    """Build the kernel with static (S, B, H) closed over as Python ints."""

    def kernel(x_ref, wx_ref, wa_ref, bg_ref,
               w1_ref, b1_ref, w2_ref, b2_ref,
               out_ref, a_seq_sc):
        # Hoist full-ref loads out of the unrolled loop.
        wx = wx_ref[...]          # (I, 4H)
        wa = wa_ref[...]          # (H, 4H)
        bg = bg_ref[...]          # (1, 4H)
        w1 = w1_ref[...]          # (H, 50)
        b1 = b1_ref[...]          # (1, 50)
        w2 = w2_ref[...]          # (50, O)
        b2 = b2_ref[...]          # (1, O)

        # ---- Prologue: input projection for all timesteps in ONE matmul.
        # (S*B, I) @ (I, 4H) -> (S*B, 4H); independent of the recurrence.
        gx_all = jnp.dot(x_ref[...], wx,
                         preferred_element_type=jnp.float32) + bg

        # ---- Serial recurrence: only a_t @ Wa + elementwise on the chain.
        # Fused gate column order: [hidden, update, forget, output].
        c_t = jnp.zeros((B, H), jnp.float32)
        a_t = jnp.zeros((B, H), jnp.float32)
        for t in range(S):                      # static unroll (S small)
            gates = (gx_all[t * B:(t + 1) * B, :]
                     + jnp.dot(a_t, wa, preferred_element_type=jnp.float32))
            # One full-width (4H = 128 lane) EUP pass each, slice quarters.
            sg = jax.nn.sigmoid(gates)
            th = jnp.tanh(gates)
            cdash = th[:, 0:H]
            fu = sg[:, H:2 * H]
            ff = sg[:, 2 * H:3 * H]
            # Reference computes fo from the *forget* layer -> fo == ff.
            fo = ff
            c_t = fu * cdash + ff * c_t
            a_t = fo * jnp.tanh(c_t)
            a_seq_sc[pl.ds(t * B, B), :] = a_t  # static start -> static view

        # ---- Epilogue: classifier head batched over all timesteps.
        # Linear(H,50) -> Sigmoid -> Dropout(eval)=id -> Linear(50,O)
        a_all = a_seq_sc[...]                                   # (S*B, H)
        h1 = jax.nn.sigmoid(
            jnp.dot(a_all, w1, preferred_element_type=jnp.float32) + b1)
        out_ref[...] = (jnp.dot(h1, w2, preferred_element_type=jnp.float32)
                        + b2).astype(out_ref.dtype)             # (S*B, O)

    return kernel


def lstm_forward(x, params, future=0):
    """x: (batch, seq, input)  ->  (output (B,S,O), predict (B,future,O))."""
    B, S, I = x.shape
    wx, wa, bg, w1, b1, w2, b2 = params
    H = wa.shape[0]
    O = w2.shape[1]

    # Time-major, flattened over (seq, batch) so the kernel's input projection
    # and classifier head are single batched matmuls.
    x2d = jnp.transpose(x, (1, 0, 2)).reshape(S * B, I)

    full = lambda arr: pl.BlockSpec(arr.shape, lambda i: (0,) * arr.ndim)

    out2d = pl.pallas_call(
        _make_lstm_kernel(S, B, H),
        out_shape=jax.ShapeDtypeStruct((S * B, O), jnp.float32),
        grid_spec=pltpu.PrefetchScalarGridSpec(
            num_scalar_prefetch=0,
            grid=(1,),                                   # single invocation
            in_specs=[
                pl.BlockSpec((S * B, I), lambda i: (0, 0)),  # whole sequence
                full(wx), full(wa), full(bg),
                full(w1), full(b1), full(w2), full(b2),
            ],
            out_specs=pl.BlockSpec((S * B, O), lambda i: (0, 0)),
            scratch_shapes=[
                pltpu.VMEM((S * B, H), jnp.float32),     # a_t for all timesteps
            ],
        ),
        compiler_params=pltpu.CompilerParams(
            dimension_semantics=("arbitrary",)),
    )(x2d, wx, wa, bg, w1, b1, w2, b2)

    output = jnp.transpose(out2d.reshape(S, B, O), (1, 0, 2))   # (B, S, O)
    # TODO(synk): future>0 autoregressive loop (requires O == I) not
    # implemented; default forward uses future=0 -> empty predict tensor.
    predict = jnp.zeros((B, future, O), dtype=jnp.float32)
    return output, predict


def init_params(key, input_size, hidden_size, output_size):
    """Deterministic init mirroring nn.Linear shapes (stored transposed)."""
    I, H, O = input_size, hidden_size, output_size
    ks = jax.random.split(key, 12)

    def lin(kw, kb, fan_in, fan_out):
        bound = 1.0 / jnp.sqrt(fan_in)
        w = jax.random.uniform(kw, (fan_in, fan_out), jnp.float32, -bound, bound)
        b = jax.random.uniform(kb, (1, fan_out), jnp.float32, -bound, bound)
        return w, b

    # gate order in the fused matrix: [hidden, update, forget, output]
    w_hid, b_hid = lin(ks[0], ks[1], I + H, H)
    w_upd, b_upd = lin(ks[2], ks[3], I + H, H)
    w_fgt, b_fgt = lin(ks[4], ks[5], I + H, H)
    w_out, b_out = lin(ks[6], ks[7], I + H, H)

    w_gates = jnp.concatenate([w_hid, w_upd, w_fgt, w_out], axis=1)   # (I+H, 4H)
    wx = w_gates[:I, :]                                               # (I, 4H)
    wa = w_gates[I:, :]                                               # (H, 4H)
    bg = jnp.concatenate([b_hid, b_upd, b_fgt, b_out], axis=1)        # (1, 4H)

    w1, b1 = lin(ks[8], ks[9], H, 50)
    w2, b2 = lin(ks[10], ks[11], 50, O)
    return wx, wa, bg, w1, b1, w2, b2


def lstm_reference(x, params):
    """Pure-JAX reference of the PyTorch forward (eval mode)."""
    wx, wa, bg, w1, b1, w2, b2 = params
    B, S, I = x.shape
    H = wa.shape[0]

    def step(carry, x_t):
        c_t, a_t = carry
        gates = x_t @ wx + a_t @ wa + bg
        cdash = jnp.tanh(gates[:, 0:H])
        fu = jax.nn.sigmoid(gates[:, H:2 * H])
        ff = jax.nn.sigmoid(gates[:, 2 * H:3 * H])
        fo = ff
        c = fu * cdash + ff * c_t
        a = fo * jnp.tanh(c)
        out = jax.nn.sigmoid(a @ w1 + b1) @ w2 + b2
        return (c, a), out

    init = (jnp.zeros((B, H)), jnp.zeros((B, H)))
    _, outs = jax.lax.scan(step, init, jnp.transpose(x, (1, 0, 2)))
    return jnp.transpose(outs, (1, 0, 2))


if __name__ == "__main__":
    batch, seq, input_size, hidden_size, output_size = 2, 8, 16, 32, 4

    key = jax.random.PRNGKey(0)
    k_x, k_p = jax.random.split(key)
    x = jax.random.normal(k_x, (batch, seq, input_size), jnp.float32)
    params = init_params(k_p, input_size, hidden_size, output_size)

    output, predict = lstm_forward(x, params, future=0)
    output = jax.block_until_ready(output)
    predict = jax.block_until_ready(predict)

    ref = lstm_reference(x, params)
    assert output.shape == (batch, seq, output_size)
    assert predict.shape == (batch, 0, output_size)
    assert jnp.allclose(output, ref, atol=1e-5, rtol=1e-5), "mismatch vs reference"

    print("KERNEL_OK")
</pallas_src>

<mosaic_0001>
module attributes {stable_mosaic.version = 11 : i64} {
  func.func @kernel(%arg0: i32, %arg1: memref<16x16xf32, #tpu.memory_space<vmem>>, %arg2: memref<16x128xf32, #tpu.memory_space<vmem>>, %arg3: memref<32x128xf32, #tpu.memory_space<vmem>>, %arg4: memref<1x128xf32, #tpu.memory_space<vmem>>, %arg5: memref<32x50xf32, #tpu.memory_space<vmem>>, %arg6: memref<1x50xf32, #tpu.memory_space<vmem>>, %arg7: memref<50x4xf32, #tpu.memory_space<vmem>>, %arg8: memref<1x4xf32, #tpu.memory_space<vmem>>, %arg9: memref<16x4xf32, #tpu.memory_space<vmem>>, %arg10: memref<16x32xf32, #tpu.memory_space<vmem>>) attributes {dimension_semantics = [#tpu.dimension_semantics<arbitrary>], iteration_bounds = array<i64: 1>, scalar_prefetch = 0 : i64, scratch_operands = 1 : i64, tpu.core_type = #tpu.core_type<tc>, window_params = [{pipeline_mode = #tpu.pipeline_mode<synchronous>, transform_indices = @transform_0, window_bounds = array<i64: 16, 16>}, {pipeline_mode = #tpu.pipeline_mode<synchronous>, transform_indices = @transform_1, window_bounds = array<i64: 16, 128>}, {pipeline_mode = #tpu.pipeline_mode<synchronous>, transform_indices = @transform_2, window_bounds = array<i64: 32, 128>}, {pipeline_mode = #tpu.pipeline_mode<synchronous>, transform_indices = @transform_3, window_bounds = array<i64: 1, 128>}, {pipeline_mode = #tpu.pipeline_mode<synchronous>, transform_indices = @transform_4, window_bounds = array<i64: 32, 50>}, {pipeline_mode = #tpu.pipeline_mode<synchronous>, transform_indices = @transform_5, window_bounds = array<i64: 1, 50>}, {pipeline_mode = #tpu.pipeline_mode<synchronous>, transform_indices = @transform_6, window_bounds = array<i64: 50, 4>}, {pipeline_mode = #tpu.pipeline_mode<synchronous>, transform_indices = @transform_7, window_bounds = array<i64: 1, 4>}, {pipeline_mode = #tpu.pipeline_mode<synchronous>, transform_indices = @transform_8, window_bounds = array<i64: 16, 4>}]} {
    %c0 = arith.constant 0 : index
    %c0_0 = arith.constant 0 : index
    %0 = vector.load %arg2[%c0, %c0_0] : memref<16x128xf32, #tpu.memory_space<vmem>>, vector<16x128xf32>
    %c0_1 = arith.constant 0 : index
    %c0_2 = arith.constant 0 : index
    %1 = vector.load %arg3[%c0_1, %c0_2] : memref<32x128xf32, #tpu.memory_space<vmem>>, vector<32x128xf32>
    %c0_3 = arith.constant 0 : index
    %c0_4 = arith.constant 0 : index
    %2 = vector.load %arg4[%c0_3, %c0_4] : memref<1x128xf32, #tpu.memory_space<vmem>>, vector<1x128xf32>
    %c0_5 = arith.constant 0 : index
    %c0_6 = arith.constant 0 : index
    %3 = vector.load %arg5[%c0_5, %c0_6] : memref<32x50xf32, #tpu.memory_space<vmem>>, vector<32x50xf32>
    %c0_7 = arith.constant 0 : index
    %c0_8 = arith.constant 0 : index
    %4 = vector.load %arg6[%c0_7, %c0_8] : memref<1x50xf32, #tpu.memory_space<vmem>>, vector<1x50xf32>
    %c0_9 = arith.constant 0 : index
    %c0_10 = arith.constant 0 : index
    %5 = vector.load %arg7[%c0_9, %c0_10] : memref<50x4xf32, #tpu.memory_space<vmem>>, vector<50x4xf32>
    %c0_11 = arith.constant 0 : index
    %c0_12 = arith.constant 0 : index
    %6 = vector.load %arg8[%c0_11, %c0_12] : memref<1x4xf32, #tpu.memory_space<vmem>>, vector<1x4xf32>
    %c0_13 = arith.constant 0 : index
    %c0_14 = arith.constant 0 : index
    %7 = vector.load %arg1[%c0_13, %c0_14] : memref<16x16xf32, #tpu.memory_space<vmem>>, vector<16x16xf32>
    %cst = arith.constant dense<0.000000e+00> : vector<16x128xf32>
    %8 = tpu.matmul %7, %0, %cst {dimension_numbers = #tpu.dot_dimension_numbers<[1], [0], [0], [1], [0, 0, 1, 1], [], []>} : vector<16x16xf32>, vector<16x128xf32>, vector<16x128xf32> -> vector<16x128xf32>
    %9 = vector.broadcast %2 : vector<1x128xf32> to vector<16x128xf32>
    %10 = arith.addf %8, %9 : vector<16x128xf32>
    %cst_15 = arith.constant 0.000000e+00 : f32
    %11 = vector.broadcast %cst_15 : f32 to vector<2x32xf32>
    %cst_16 = arith.constant 0.000000e+00 : f32
    %12 = vector.broadcast %cst_16 : f32 to vector<2x32xf32>
    %13 = vector.extract_strided_slice %10 {offsets = [0, 0], sizes = [2, 128], strides = [1, 1]} : vector<16x128xf32> to vector<2x128xf32>
    %cst_17 = arith.constant dense<0.000000e+00> : vector<2x128xf32>
    %14 = tpu.matmul %12, %1, %cst_17 {dimension_numbers = #tpu.dot_dimension_numbers<[1], [0], [0], [1], [0, 0, 1, 1], [], []>} : vector<2x32xf32>, vector<32x128xf32>, vector<2x128xf32> -> vector<2x128xf32>
    %15 = arith.addf %13, %14 : vector<2x128xf32>
    %16 = arith.negf %15 : vector<2x128xf32>
    %17 = math.exp %16 : vector<2x128xf32>
    %cst_18 = arith.constant 1.000000e+00 : f32
    %18 = vector.broadcast %cst_18 : f32 to vector<2x128xf32>
    %19 = arith.addf %18, %17 : vector<2x128xf32>
    %20 = arith.divf %18, %19 : vector<2x128xf32>
    %21 = math.tanh %15 : vector<2x128xf32>
    %22 = vector.extract_strided_slice %21 {offsets = [0, 0], sizes = [2, 32], strides = [1, 1]} : vector<2x128xf32> to vector<2x32xf32>
    %23 = vector.extract_strided_slice %20 {offsets = [0, 32], sizes = [2, 32], strides = [1, 1]} : vector<2x128xf32> to vector<2x32xf32>
    %24 = vector.extract_strided_slice %20 {offsets = [0, 64], sizes = [2, 32], strides = [1, 1]} : vector<2x128xf32> to vector<2x32xf32>
    %25 = arith.mulf %23, %22 : vector<2x32xf32>
    %26 = arith.mulf %24, %11 : vector<2x32xf32>
    %27 = arith.addf %25, %26 : vector<2x32xf32>
    %28 = math.tanh %27 : vector<2x32xf32>
    %29 = arith.mulf %24, %28 : vector<2x32xf32>
    %c0_19 = arith.constant 0 : index
    %c0_20 = arith.constant 0 : index
    %30 = vector.load %arg10[%c0_19, %c0_20] : memref<16x32xf32, #tpu.memory_space<vmem>>, vector<2x32xf32>
    tpu.vector_store %arg10[%c0_19, %c0_20], %29 {strides = array<i32>} : memref<16x32xf32, #tpu.memory_space<vmem>>, vector<2x32xf32>,
    %31 = vector.extract_strided_slice %10 {offsets = [2, 0], sizes = [2, 128], strides = [1, 1]} : vector<16x128xf32> to vector<2x128xf32>
    %cst_21 = arith.constant dense<0.000000e+00> : vector<2x128xf32>
    %32 = tpu.matmul %29, %1, %cst_21 {dimension_numbers = #tpu.dot_dimension_numbers<[1], [0], [0], [1], [0, 0, 1, 1], [], []>} : vector<2x32xf32>, vector<32x128xf32>, vector<2x128xf32> -> vector<2x128xf32>
    %33 = arith.addf %31, %32 : vector<2x128xf32>
    %34 = arith.negf %33 : vector<2x128xf32>
    %35 = math.exp %34 : vector<2x128xf32>
    %cst_22 = arith.constant 1.000000e+00 : f32
    %36 = vector.broadcast %cst_22 : f32 to vector<2x128xf32>
    %37 = arith.addf %36, %35 : vector<2x128xf32>
    %38 = arith.divf %36, %37 : vector<2x128xf32>
    %39 = math.tanh %33 : vector<2x128xf32>
    %40 = vector.extract_strided_slice %39 {offsets = [0, 0], sizes = [2, 32], strides = [1, 1]} : vector<2x128xf32> to vector<2x32xf32>
    %41 = vector.extract_strided_slice %38 {offsets = [0, 32], sizes = [2, 32], strides = [1, 1]} : vector<2x128xf32> to vector<2x32xf32>
    %42 = vector.extract_strided_slice %38 {offsets = [0, 64], sizes = [2, 32], strides = [1, 1]} : vector<2x128xf32> to vector<2x32xf32>
    %43 = arith.mulf %41, %40 : vector<2x32xf32>
    %44 = arith.mulf %42, %27 : vector<2x32xf32>
    %45 = arith.addf %43, %44 : vector<2x32xf32>
    %46 = math.tanh %45 : vector<2x32xf32>
    %47 = arith.mulf %42, %46 : vector<2x32xf32>
    %c2 = arith.constant 2 : index
    %c0_23 = arith.constant 0 : index
    %48 = vector.load %arg10[%c2, %c0_23] : memref<16x32xf32, #tpu.memory_space<vmem>>, vector<2x32xf32>
    tpu.vector_store %arg10[%c2, %c0_23], %47 {strides = array<i32>} : memref<16x32xf32, #tpu.memory_space<vmem>>, vector<2x32xf32>,
    %49 = vector.extract_strided_slice %10 {offsets = [4, 0], sizes = [2, 128], strides = [1, 1]} : vector<16x128xf32> to vector<2x128xf32>
    %cst_24 = arith.constant dense<0.000000e+00> : vector<2x128xf32>
    %50 = tpu.matmul %47, %1, %cst_24 {dimension_numbers = #tpu.dot_dimension_numbers<[1], [0], [0], [1], [0, 0, 1, 1], [], []>} : vector<2x32xf32>, vector<32x128xf32>, vector<2x128xf32> -> vector<2x128xf32>
    %51 = arith.addf %49, %50 : vector<2x128xf32>
    %52 = arith.negf %51 : vector<2x128xf32>
    %53 = math.exp %52 : vector<2x128xf32>
    %cst_25 = arith.constant 1.000000e+00 : f32
    %54 = vector.broadcast %cst_25 : f32 to vector<2x128xf32>
    %55 = arith.addf %54, %53 : vector<2x128xf32>
    %56 = arith.divf %54, %55 : vector<2x128xf32>
    %57 = math.tanh %51 : vector<2x128xf32>
    %58 = vector.extract_strided_slice %57 {offsets = [0, 0], sizes = [2, 32], strides = [1, 1]} : vector<2x128xf32> to vector<2x32xf32>
    %59 = vector.extract_strided_slice %56 {offsets = [0, 32], sizes = [2, 32], strides = [1, 1]} : vector<2x128xf32> to vector<2x32xf32>
    %60 = vector.extract_strided_slice %56 {offsets = [0, 64], sizes = [2, 32], strides = [1, 1]} : vector<2x128xf32> to vector<2x32xf32>
    %61 = arith.mulf %59, %58 : vector<2x32xf32>
    %62 = arith.mulf %60, %45 : vector<2x32xf32>
    %63 = arith.addf %61, %62 : vector<2x32xf32>
    %64 = math.tanh %63 : vector<2x32xf32>
    %65 = arith.mulf %60, %64 : vector<2x32xf32>
    %c4 = arith.constant 4 : index
    %c0_26 = arith.constant 0 : index
    %66 = vector.load %arg10[%c4, %c0_26] : memref<16x32xf32, #tpu.memory_space<vmem>>, vector<2x32xf32>
    tpu.vector_store %arg10[%c4, %c0_26], %65 {strides = array<i32>} : memref<16x32xf32, #tpu.memory_space<vmem>>, vector<2x32xf32>,
    %67 = vector.extract_strided_slice %10 {offsets = [6, 0], sizes = [2, 128], strides = [1, 1]} : vector<16x128xf32> to vector<2x128xf32>
    %cst_27 = arith.constant dense<0.000000e+00> : vector<2x128xf32>
    %68 = tpu.matmul %65, %1, %cst_27 {dimension_numbers = #tpu.dot_dimension_numbers<[1], [0], [0], [1], [0, 0, 1, 1], [], []>} : vector<2x32xf32>, vector<32x128xf32>, vector<2x128xf32> -> vector<2x128xf32>
    %69 = arith.addf %67, %68 : vector<2x128xf32>
    %70 = arith.negf %69 : vector<2x128xf32>
    %71 = math.exp %70 : vector<2x128xf32>
    %cst_28 = arith.constant 1.000000e+00 : f32
    %72 = vector.broadcast %cst_28 : f32 to vector<2x128xf32>
    %73 = arith.addf %72, %71 : vector<2x128xf32>
    %74 = arith.divf %72, %73 : vector<2x128xf32>
    %75 = math.tanh %69 : vector<2x128xf32>
    %76 = vector.extract_strided_slice %75 {offsets = [0, 0], sizes = [2, 32], strides = [1, 1]} : vector<2x128xf32> to vector<2x32xf32>
    %77 = vector.extract_strided_slice %74 {offsets = [0, 32], sizes = [2, 32], strides = [1, 1]} : vector<2x128xf32> to vector<2x32xf32>
    %78 = vector.extract_strided_slice %74 {offsets = [0, 64], sizes = [2, 32], strides = [1, 1]} : vector<2x128xf32> to vector<2x32xf32>
    %79 = arith.mulf %77, %76 : vector<2x32xf32>
    %80 = arith.mulf %78, %63 : vector<2x32xf32>
    %81 = arith.addf %79, %80 : vector<2x32xf32>
    %82 = math.tanh %81 : vector<2x32xf32>
    %83 = arith.mulf %78, %82 : vector<2x32xf32>
    %c6 = arith.constant 6 : index
    %c0_29 = arith.constant 0 : index
    %84 = vector.load %arg10[%c6, %c0_29] : memref<16x32xf32, #tpu.memory_space<vmem>>, vector<2x32xf32>
    tpu.vector_store %arg10[%c6, %c0_29], %83 {strides = array<i32>} : memref<16x32xf32, #tpu.memory_space<vmem>>, vector<2x32xf32>,
    %85 = vector.extract_strided_slice %10 {offsets = [8, 0], sizes = [2, 128], strides = [1, 1]} : vector<16x128xf32> to vector<2x128xf32>
    %cst_30 = arith.constant dense<0.000000e+00> : vector<2x128xf32>
    %86 = tpu.matmul %83, %1, %cst_30 {dimension_numbers = #tpu.dot_dimension_numbers<[1], [0], [0], [1], [0, 0, 1, 1], [], []>} : vector<2x32xf32>, vector<32x128xf32>, vector<2x128xf32> -> vector<2x128xf32>
    %87 = arith.addf %85, %86 : vector<2x128xf32>
    %88 = arith.negf %87 : vector<2x128xf32>
    %89 = math.exp %88 : vector<2x128xf32>
    %cst_31 = arith.constant 1.000000e+00 : f32
    %90 = vector.broadcast %cst_31 : f32 to vector<2x128xf32>
    %91 = arith.addf %90, %89 : vector<2x128xf32>
    %92 = arith.divf %90, %91 : vector<2x128xf32>
    %93 = math.tanh %87 : vector<2x128xf32>
    %94 = vector.extract_strided_slice %93 {offsets = [0, 0], sizes = [2, 32], strides = [1, 1]} : vector<2x128xf32> to vector<2x32xf32>
    %95 = vector.extract_strided_slice %92 {offsets = [0, 32], sizes = [2, 32], strides = [1, 1]} : vector<2x128xf32> to vector<2x32xf32>
    %96 = vector.extract_strided_slice %92 {offsets = [0, 64], sizes = [2, 32], strides = [1, 1]} : vector<2x128xf32> to vector<2x32xf32>
    %97 = arith.mulf %95, %94 : vector<2x32xf32>
    %98 = arith.mulf %96, %81 : vector<2x32xf32>
    %99 = arith.addf %97, %98 : vector<2x32xf32>
    %100 = math.tanh %99 : vector<2x32xf32>
    %101 = arith.mulf %96, %100 : vector<2x32xf32>
    %c8 = arith.constant 8 : index
    %c0_32 = arith.constant 0 : index
    %102 = vector.load %arg10[%c8, %c0_32] : memref<16x32xf32, #tpu.memory_space<vmem>>, vector<2x32xf32>
    tpu.vector_store %arg10[%c8, %c0_32], %101 {strides = array<i32>} : memref<16x32xf32, #tpu.memory_space<vmem>>, vector<2x32xf32>,
    %103 = vector.extract_strided_slice %10 {offsets = [10, 0], sizes = [2, 128], strides = [1, 1]} : vector<16x128xf32> to vector<2x128xf32>
    %cst_33 = arith.constant dense<0.000000e+00> : vector<2x128xf32>
    %104 = tpu.matmul %101, %1, %cst_33 {dimension_numbers = #tpu.dot_dimension_numbers<[1], [0], [0], [1], [0, 0, 1, 1], [], []>} : vector<2x32xf32>, vector<32x128xf32>, vector<2x128xf32> -> vector<2x128xf32>
    %105 = arith.addf %103, %104 : vector<2x128xf32>
    %106 = arith.negf %105 : vector<2x128xf32>
    %107 = math.exp %106 : vector<2x128xf32>
    %cst_34 = arith.constant 1.000000e+00 : f32
    %108 = vector.broadcast %cst_34 : f32 to vector<2x128xf32>
    %109 = arith.addf %108, %107 : vector<2x128xf32>
    %110 = arith.divf %108, %109 : vector<2x128xf32>
    %111 = math.tanh %105 : vector<2x128xf32>
    %112 = vector.extract_strided_slice %111 {offsets = [0, 0], sizes = [2, 32], strides = [1, 1]} : vector<2x128xf32> to vector<2x32xf32>
    %113 = vector.extract_strided_slice %110 {offsets = [0, 32], sizes = [2, 32], strides = [1, 1]} : vector<2x128xf32> to vector<2x32xf32>
    %114 = vector.extract_strided_slice %110 {offsets = [0, 64], sizes = [2, 32], strides = [1, 1]} : vector<2x128xf32> to vector<2x32xf32>
    %115 = arith.mulf %113, %112 : vector<2x32xf32>
    %116 = arith.mulf %114, %99 : vector<2x32xf32>
    %117 = arith.addf %115, %116 : vector<2x32xf32>
    %118 = math.tanh %117 : vector<2x32xf32>
    %119 = arith.mulf %114, %118 : vector<2x32xf32>
    %c10 = arith.constant 10 : index
    %c0_35 = arith.constant 0 : index
    %120 = vector.load %arg10[%c10, %c0_35] : memref<16x32xf32, #tpu.memory_space<vmem>>, vector<2x32xf32>
    tpu.vector_store %arg10[%c10, %c0_35], %119 {strides = array<i32>} : memref<16x32xf32, #tpu.memory_space<vmem>>, vector<2x32xf32>,
    %121 = vector.extract_strided_slice %10 {offsets = [12, 0], sizes = [2, 128], strides = [1, 1]} : vector<16x128xf32> to vector<2x128xf32>
    %cst_36 = arith.constant dense<0.000000e+00> : vector<2x128xf32>
    %122 = tpu.matmul %119, %1, %cst_36 {dimension_numbers = #tpu.dot_dimension_numbers<[1], [0], [0], [1], [0, 0, 1, 1], [], []>} : vector<2x32xf32>, vector<32x128xf32>, vector<2x128xf32> -> vector<2x128xf32>
    %123 = arith.addf %121, %122 : vector<2x128xf32>
    %124 = arith.negf %123 : vector<2x128xf32>
    %125 = math.exp %124 : vector<2x128xf32>
    %cst_37 = arith.constant 1.000000e+00 : f32
    %126 = vector.broadcast %cst_37 : f32 to vector<2x128xf32>
    %127 = arith.addf %126, %125 : vector<2x128xf32>
    %128 = arith.divf %126, %127 : vector<2x128xf32>
    %129 = math.tanh %123 : vector<2x128xf32>
    %130 = vector.extract_strided_slice %129 {offsets = [0, 0], sizes = [2, 32], strides = [1, 1]} : vector<2x128xf32> to vector<2x32xf32>
    %131 = vector.extract_strided_slice %128 {offsets = [0, 32], sizes = [2, 32], strides = [1, 1]} : vector<2x128xf32> to vector<2x32xf32>
    %132 = vector.extract_strided_slice %128 {offsets = [0, 64], sizes = [2, 32], strides = [1, 1]} : vector<2x128xf32> to vector<2x32xf32>
    %133 = arith.mulf %131, %130 : vector<2x32xf32>
    %134 = arith.mulf %132, %117 : vector<2x32xf32>
    %135 = arith.addf %133, %134 : vector<2x32xf32>
    %136 = math.tanh %135 : vector<2x32xf32>
    %137 = arith.mulf %132, %136 : vector<2x32xf32>
    %c12 = arith.constant 12 : index
    %c0_38 = arith.constant 0 : index
    %138 = vector.load %arg10[%c12, %c0_38] : memref<16x32xf32, #tpu.memory_space<vmem>>, vector<2x32xf32>
    tpu.vector_store %arg10[%c12, %c0_38], %137 {strides = array<i32>} : memref<16x32xf32, #tpu.memory_space<vmem>>, vector<2x32xf32>,
    %139 = vector.extract_strided_slice %10 {offsets = [14, 0], sizes = [2, 128], strides = [1, 1]} : vector<16x128xf32> to vector<2x128xf32>
    %cst_39 = arith.constant dense<0.000000e+00> : vector<2x128xf32>
    %140 = tpu.matmul %137, %1, %cst_39 {dimension_numbers = #tpu.dot_dimension_numbers<[1], [0], [0], [1], [0, 0, 1, 1], [], []>} : vector<2x32xf32>, vector<32x128xf32>, vector<2x128xf32> -> vector<2x128xf32>
    %141 = arith.addf %139, %140 : vector<2x128xf32>
    %142 = arith.negf %141 : vector<2x128xf32>
    %143 = math.exp %142 : vector<2x128xf32>
    %cst_40 = arith.constant 1.000000e+00 : f32
    %144 = vector.broadcast %cst_40 : f32 to vector<2x128xf32>
    %145 = arith.addf %144, %143 : vector<2x128xf32>
    %146 = arith.divf %144, %145 : vector<2x128xf32>
    %147 = math.tanh %141 : vector<2x128xf32>
    %148 = vector.extract_strided_slice %147 {offsets = [0, 0], sizes = [2, 32], strides = [1, 1]} : vector<2x128xf32> to vector<2x32xf32>
    %149 = vector.extract_strided_slice %146 {offsets = [0, 32], sizes = [2, 32], strides = [1, 1]} : vector<2x128xf32> to vector<2x32xf32>
    %150 = vector.extract_strided_slice %146 {offsets = [0, 64], sizes = [2, 32], strides = [1, 1]} : vector<2x128xf32> to vector<2x32xf32>
    %151 = arith.mulf %149, %148 : vector<2x32xf32>
    %152 = arith.mulf %150, %135 : vector<2x32xf32>
    %153 = arith.addf %151, %152 : vector<2x32xf32>
    %154 = math.tanh %153 : vector<2x32xf32>
    %155 = arith.mulf %150, %154 : vector<2x32xf32>
    %c14 = arith.constant 14 : index
    %c0_41 = arith.constant 0 : index
    %156 = vector.load %arg10[%c14, %c0_41] : memref<16x32xf32, #tpu.memory_space<vmem>>, vector<2x32xf32>
    tpu.vector_store %arg10[%c14, %c0_41], %155 {strides = array<i32>} : memref<16x32xf32, #tpu.memory_space<vmem>>, vector<2x32xf32>,
    %c0_42 = arith.constant 0 : index
    %c0_43 = arith.constant 0 : index
    %157 = vector.load %arg10[%c0_42, %c0_43] : memref<16x32xf32, #tpu.memory_space<vmem>>, vector<16x32xf32>
    %cst_44 = arith.constant dense<0.000000e+00> : vector<16x50xf32>
    %158 = tpu.matmul %157, %3, %cst_44 {dimension_numbers = #tpu.dot_dimension_numbers<[1], [0], [0], [1], [0, 0, 1, 1], [], []>} : vector<16x32xf32>, vector<32x50xf32>, vector<16x50xf32> -> vector<16x50xf32>
    %159 = vector.broadcast %4 : vector<1x50xf32> to vector<16x50xf32>
    %160 = arith.addf %158, %159 : vector<16x50xf32>
    %161 = arith.negf %160 : vector<16x50xf32>
    %162 = math.exp %161 : vector<16x50xf32>
    %cst_45 = arith.constant 1.000000e+00 : f32
    %163 = vector.broadcast %cst_45 : f32 to vector<16x50xf32>
    %164 = arith.addf %163, %162 : vector<16x50xf32>
    %165 = arith.divf %163, %164 : vector<16x50xf32>
    %cst_46 = arith.constant dense<0.000000e+00> : vector<16x4xf32>
    %166 = tpu.matmul %165, %5, %cst_46 {dimension_numbers = #tpu.dot_dimension_numbers<[1], [0], [0], [1], [0, 0, 1, 1], [], []>} : vector<16x50xf32>, vector<50x4xf32>, vector<16x4xf32> -> vector<16x4xf32>
    %167 = vector.broadcast %6 : vector<1x4xf32> to vector<16x4xf32>
    %168 = arith.addf %166, %167 : vector<16x4xf32>
    %c0_47 = arith.constant 0 : index
    %c0_48 = arith.constant 0 : index
    %169 = vector.load %arg9[%c0_47, %c0_48] : memref<16x4xf32, #tpu.memory_space<vmem>>, vector<16x4xf32>
    tpu.vector_store %arg9[%c0_47, %c0_48], %168 {strides = array<i32>} : memref<16x4xf32, #tpu.memory_space<vmem>>, vector<16x4xf32>,
    return
  }
  func.func @transform_0(%arg0: i32) -> (i32, i32) {
    %c0_i32 = arith.constant 0 : i32
    %c0_i32_0 = arith.constant 0 : i32
    %c0_i32_1 = arith.constant 0 : i32
    return %c0_i32, %c0_i32_0 : i32, i32
  }
  func.func @transform_1(%arg0: i32) -> (i32, i32) {
    %c0_i32 = arith.constant 0 : i32
    %c0_i32_0 = arith.constant 0 : i32
    %c0_i32_1 = arith.constant 0 : i32
    return %c0_i32, %c0_i32_0 : i32, i32
  }
  func.func @transform_2(%arg0: i32) -> (i32, i32) {
    %c0_i32 = arith.constant 0 : i32
    %c0_i32_0 = arith.constant 0 : i32
    %c0_i32_1 = arith.constant 0 : i32
    return %c0_i32, %c0_i32_0 : i32, i32
  }
  func.func @transform_3(%arg0: i32) -> (i32, i32) {
    %c0_i32 = arith.constant 0 : i32
    %c0_i32_0 = arith.constant 0 : i32
    %c0_i32_1 = arith.constant 0 : i32
    return %c0_i32, %c0_i32_0 : i32, i32
  }
  func.func @transform_4(%arg0: i32) -> (i32, i32) {
    %c0_i32 = arith.constant 0 : i32
    %c0_i32_0 = arith.constant 0 : i32
    %c0_i32_1 = arith.constant 0 : i32
    return %c0_i32, %c0_i32_0 : i32, i32
  }
  func.func @transform_5(%arg0: i32) -> (i32, i32) {
    %c0_i32 = arith.constant 0 : i32
    %c0_i32_0 = arith.constant 0 : i32
    %c0_i32_1 = arith.constant 0 : i32
    return %c0_i32, %c0_i32_0 : i32, i32
  }
  func.func @transform_6(%arg0: i32) -> (i32, i32) {
    %c0_i32 = arith.constant 0 : i32
    %c0_i32_0 = arith.constant 0 : i32
    %c0_i32_1 = arith.constant 0 : i32
    return %c0_i32, %c0_i32_0 : i32, i32
  }
  func.func @transform_7(%arg0: i32) -> (i32, i32) {
    %c0_i32 = arith.constant 0 : i32
    %c0_i32_0 = arith.constant 0 : i32
    %c0_i32_1 = arith.constant 0 : i32
    return %c0_i32, %c0_i32_0 : i32, i32
  }
  func.func @transform_8(%arg0: i32) -> (i32, i32) {
    %c0_i32 = arith.constant 0 : i32
    %c0_i32_0 = arith.constant 0 : i32
    %c0_i32_1 = arith.constant 0 : i32
    return %c0_i32, %c0_i32_0 : i32, i32
  }
}

</mosaic_0001>

<llo_original>
// kernel: tpu_custom_call.1
$region0: #{tpu_custom_call.1}
  #allocation0 [shape = 'u32[]', space=smem, size = 0x4, offset = 0x4, fixed_abs, tag = 'smem constant byte address 0x4 - core index']
  #allocation1 [shape = 'u32[144,128]{1,0:T(1,128)}', space=vmem, size = 0x12000, scoped, tag = 'internal scratch']
  #allocation2 [shape = 'f32[16,32]{1,0:T(8,128)}', space=vmem, size = 0x2000, scoped, tag = 'scratch operand']
  %s0 = inlined_call_operand.hbm [shape: f32[16,16], index: 0, kind: input, shape index: {}]
  %s1 = inlined_call_operand.hbm [shape: f32[16,128], index: 1, kind: input, shape index: {}]
  %s2 = inlined_call_operand.vmem [shape: f32[32,128], index: 2, kind: input, shape index: {}]
  %s3 = inlined_call_operand.vmem [shape: f32[1,128], index: 3, kind: input, shape index: {}]
  %s4 = inlined_call_operand.vmem [shape: f32[32,50], index: 4, kind: input, shape index: {}]
  %s5 = inlined_call_operand.vmem [shape: f32[1,50], index: 5, kind: input, shape index: {}]
  %s6 = inlined_call_operand.vmem [shape: f32[50,4], index: 6, kind: input, shape index: {}]
  %s7 = inlined_call_operand.vmem [shape: f32[1,4], index: 7, kind: input, shape index: {}]
  %s8 = inlined_call_operand.vmem [shape: f32[16,4], index: 8, kind: output, shape index: {}]
  %s9 = sld [smem:[#allocation0]]
  $region50: #{tpu_custom_call.1} parent=0
    _
  %s11 = ssub.s32 1, %s9
  %s12 = scalar_select 0, %s11, %s9
  $region1: #{tpu_custom_call.1} parent=0
    #allocation3 [shape = 'u8[8192]{0}', space=vmem, size = 0x2000, scoped, tag = 'input window, operand 0, single buffered']
    #allocation4 [shape = 's32[1]{0}', space=sflag, size = 0x4, scoped, tag = 'scoped memory for tpu_custom_call.1']
    #allocation5 [shape = 'u8[8192]{0}', space=vmem, size = 0x2000, scoped, tag = 'input window, operand 1, single buffered']
    #allocation6 [shape = 's32[1]{0}', space=sflag, size = 0x4, scoped, tag = 'scoped memory for tpu_custom_call.1']
    %13 = vsyncpa [#allocation4], 0
    %14 = vsyncpa [#allocation6], 0
    // Predicated region
    $region2: #{tpu_custom_call.1} parent=1 // pred_check
      _
    $region3: #{tpu_custom_call.1} parent=1 // pred_check_branch
      %16 = sbr.rel (0) target = $region5
    $region4: #{tpu_custom_call.1} parent=1 // pred_region
      %s18 = ssub.s32 256, 256
      %19 = vsyncadd [#allocation4], %s18
      %s20 = sshll.u32 [#allocation3], 4
      %s21 = int_to_ptr.vmem [resolvable:$true] %s20
      %26 = dma.hbm_to_vmem [thread:$0]  %s0, 256, %s21, [#allocation4], 128, 128, 8
    $region5: #{tpu_custom_call.1} parent=1 // pred_fallthru
      _
    // Predicated region
    $region6: #{tpu_custom_call.1} parent=1 // pred_check
      _
    $region7: #{tpu_custom_call.1} parent=1 // pred_check_branch
      %28 = sbr.rel (0) target = $region9
    $region8: #{tpu_custom_call.1} parent=1 // pred_region
      %s30 = ssub.s32 256, 256
      %31 = vsyncadd [#allocation6], %s30
      %s32 = sshll.u32 [#allocation5], 4
      %s33 = int_to_ptr.vmem [resolvable:$true] %s32
      %38 = dma.hbm_to_vmem [thread:$0]  %s1, 256, %s33, [#allocation6], 128, 128, 8
    $region9: #{tpu_custom_call.1} parent=1 // pred_fallthru
      _
    // Predicated region
    $region10: #{tpu_custom_call.1} parent=1 // pred_check
      _
    $region11: #{tpu_custom_call.1} parent=1 // pred_check_branch
      %40 = sbr.rel (0) target = $region13
    $region12: #{tpu_custom_call.1} parent=1 // pred_region
      _
    $region13: #{tpu_custom_call.1} parent=1 // pred_fallthru
      _
    // Predicated region
    $region14: #{tpu_custom_call.1} parent=1 // pred_check
      _
    $region15: #{tpu_custom_call.1} parent=1 // pred_check_branch
      %42 = sbr.rel (0) target = $region17
    $region16: #{tpu_custom_call.1} parent=1 // pred_region
      _
    $region17: #{tpu_custom_call.1} parent=1 // pred_fallthru
      _
    // Predicated region
    $region18: #{tpu_custom_call.1} parent=1 // pred_check
      _
    $region19: #{tpu_custom_call.1} parent=1 // pred_check_branch
      %44 = sbr.rel (0) target = $region21
    $region20: #{tpu_custom_call.1} parent=1 // pred_region
      _
    $region21: #{tpu_custom_call.1} parent=1 // pred_fallthru
      _
    // Predicated region
    $region22: #{tpu_custom_call.1} parent=1 // pred_check
      _
    $region23: #{tpu_custom_call.1} parent=1 // pred_check_branch
      %46 = sbr.rel (0) target = $region25
    $region24: #{tpu_custom_call.1} parent=1 // pred_region
      _
    $region25: #{tpu_custom_call.1} parent=1 // pred_fallthru
      _
    // Predicated region
    $region26: #{tpu_custom_call.1} parent=1 // pred_check
      _
    $region27: #{tpu_custom_call.1} parent=1 // pred_check_branch
      %48 = sbr.rel (0) target = $region29
    $region28: #{tpu_custom_call.1} parent=1 // pred_region
      _
    $region29: #{tpu_custom_call.1} parent=1 // pred_fallthru
      _
    // Predicated region
    $region30: #{tpu_custom_call.1} parent=1 // pred_check
      _
    $region31: #{tpu_custom_call.1} parent=1 // pred_check_branch
      %50 = sbr.rel (0) target = $region33
    $region32: #{tpu_custom_call.1} parent=1 // pred_region
      _
    $region33: #{tpu_custom_call.1} parent=1 // pred_fallthru
      _
    // Predicated region
    $region34: #{tpu_custom_call.1} parent=1 // pred_check
      _
    $region35: #{tpu_custom_call.1} parent=1 // pred_check_branch
      %52 = sbr.rel (0) target = $region37
    $region36: #{tpu_custom_call.1} parent=1 // pred_region
      %53 = dma.done [#allocation4], 256
    $region37: #{tpu_custom_call.1} parent=1 // pred_fallthru
      _
    // Predicated region
    $region38: #{tpu_custom_call.1} parent=1 // pred_check
      _
    $region39: #{tpu_custom_call.1} parent=1 // pred_check_branch
      %55 = sbr.rel (0) target = $region41
    $region40: #{tpu_custom_call.1} parent=1 // pred_region
      %56 = dma.done [#allocation6], 256
    $region41: #{tpu_custom_call.1} parent=1 // pred_fallthru
      _
    %v57 = vld [vmem:[#allocation5] sm:$0xff]
    %v58 = vld [vmem:[#allocation5 + $0x8] sm:$0xff]
    %v59 = vld [vmem:[%s2] sm:$0xff]
    %v60 = vld [vmem:[%s2 + $0x8] sm:$0xff]
    %v61 = vld [vmem:[%s2 + $0x10] sm:$0xff]
    %v62 = vld [vmem:[%s2 + $0x18] sm:$0xff]
    %v63 = vld [vmem:[%s3] sm:$0x1]
    %v64 = vld [vmem:[%s4] sm:$0xff]
    %v65 = vld [vmem:[%s4 + $0x8] sm:$0xff]
    %v66 = vld [vmem:[%s4 + $0x10] sm:$0xff]
    %v67 = vld [vmem:[%s4 + $0x18] sm:$0xff]
    %v68 = vld [vmem:[%s5] sm:$0x1]
    %v69 = vld [vmem:[%s6] sm:$0xff]
    %v70 = vld [vmem:[%s6 + $0x8] sm:$0xff]
    %v71 = vld [vmem:[%s6 + $0x10] sm:$0xff]
    %v72 = vld [vmem:[%s6 + $0x18] sm:$0xff]
    %v73 = vld [vmem:[%s6 + $0x20] sm:$0xff]
    %v74 = vld [vmem:[%s6 + $0x28] sm:$0xff]
    %v75 = vld [vmem:[%s6 + $0x30] sm:$0x3]
    %v76 = vld [vmem:[%s7] sm:$0x1]
    %v77 = vld [vmem:[#allocation3] sm:$0xff]
    %v78 = vld [vmem:[#allocation3 + $0x8] sm:$0xff]
    %v80 = vlaneseq
    %v81 = vshrl.u32 %v80, 7
    %v82 = vsub.s32 0, %v81
    %v83 = vrot.slane %v63, %v82
    %vm85 = vcmask 130048
    %v87 = vsel %vm85, %v77, 0
    %v90 = vsel %vm85, %v78, 0
    %92 = vmatprep.subr.mxu0 0.0
    %93 = vmatpush1.msra.mxu0 %v57
    %94 = vmatprep.subr.mxu0 0.0
    %95 = vmatpush1.msra.mxu0 %v58
    %96 = vmatprep.subr.mxu0 0.0
    %97 = vmatpush1.msra.mxu0 0.0
    %98 = vmatprep.subr.mxu0 0.0
    %99 = vmatpush1.msra.mxu0 0.0
    %100 = vmatprep.subr.mxu0 0.0
    %101 = vmatpush1.msra.mxu0 0.0
    %102 = vmatprep.subr.mxu0 0.0
    %103 = vmatpush1.msra.mxu0 0.0
    %104 = vmatprep.subr.mxu0 0.0
    %105 = vmatpush1.msra.mxu0 0.0
    %106 = vmatprep.subr.mxu0 0.0
    %107 = vmatpush1.msra.mxu0 0.0
    %108 = vmatprep.subr.mxu0 0.0
    %109 = vmatpush1.msra.mxu0 0.0
    %110 = vmatprep.subr.mxu0 0.0
    %111 = vmatpush1.msra.mxu0 0.0
    %112 = vmatprep.subr.mxu0 0.0
    %113 = vmatpush1.msra.mxu0 0.0
    %114 = vmatprep.subr.mxu0 0.0
    %115 = vmatpush1.msra.mxu0 0.0
    %116 = vmatprep.subr.mxu0 0.0
    %117 = vmatpush1.msra.mxu0 0.0
    %118 = vmatprep.subr.mxu0 0.0
    %119 = vmatpush1.msra.mxu0 0.0
    %120 = vmatprep.subr.mxu0 0.0
    %121 = vmatpush1.msra.mxu0 0.0
    %122 = vmatprep.subr.mxu0 0.0
    %123 = vmatpush1.msra.mxu0 0.0
    %124 = vmatprep.subr.mxu0 0.0
    %125 = vmatpush1.msra.mxu0 0.0
    %126 = vmatprep.subr.mxu0 0.0
    %127 = vmatpush1.msra.mxu0 0.0
    %128 = vmatprep.subr.mxu0 0.0
    %129 = vmatpush1.msra.mxu0 0.0
    %130 = vmatprep.subr.mxu0 0.0
    %131 = vmatpush1.msra.mxu0 0.0
    %132 = vmatprep.subr.mxu0 0.0
    %133 = vmatpush1.msra.mxu0 0.0
    %134 = vmatprep.subr.mxu0 0.0
    %135 = vmatpush1.msra.mxu0 0.0
    %136 = vmatprep.subr.mxu0 0.0
    %137 = vmatpush1.msra.mxu0 0.0
    %138 = vmatprep.subr.mxu0 0.0
    %139 = vmatpush1.msra.mxu0 0.0
    %140 = vmatprep.subr.mxu0 0.0
    %141 = vmatpush1.msra.mxu0 0.0
    %142 = vmatprep.subr.mxu0 0.0
    %143 = vmatpush1.msra.mxu0 0.0
    %144 = vmatprep.subr.mxu0 0.0
    %145 = vmatpush1.msra.mxu0 0.0
    %146 = vmatprep.subr.mxu0 0.0
    %147 = vmatpush1.msra.mxu0 0.0
    %148 = vmatprep.subr.mxu0 0.0
    %149 = vmatpush1.msra.mxu0 0.0
    %150 = vmatprep.subr.mxu0 0.0
    %151 = vmatpush1.msra.mxu0 0.0
    %152 = vmatprep.subr.mxu0 0.0
    %153 = vmatpush1.msra.mxu0 0.0
    %154 = vmatprep.subr.mxu0 0.0
    %155 = vmatpush1.msra.mxu0 0.0
    %156 = vmatprep.mubr.f32.mxu0 0.0
    %157 = vmatmul.mubr.f32.gmra.mrb[0].mxu0 %v87
    %v158 = vpop.f32.mrb[0].mxu0
    %v159 = vadd.f32 %v83, %v158
    %v160 = vpop.f32.mrb[0].mxu0
    %161 = vmatprep.mubr.f32.mxu0 0.0
    %162 = vmatmul.mubr.f32.gmra.mrb[0].mxu0 %v90
    %v163 = vpop.f32.mrb[0].mxu0
    %v164 = vadd.f32 %v83, %v163
    %v165 = vpop.f32.mrb[0].mxu0
    %166 = vdwg.mxu0
    %vm167 = vcmask 261120
    %v169 = vsel %vm167, 0.0, 0
    %171 = vmatprep.subr.mxu0 0.0
    %172 = vmatpush1.msra.mxu0 %v59
    %173 = vmatprep.subr.mxu0 0.0
    %174 = vmatpush1.msra.mxu0 %v60
    %175 = vmatprep.subr.mxu0 0.0
    %176 = vmatpush1.msra.mxu0 %v61
    %177 = vmatprep.subr.mxu0 0.0
    %178 = vmatpush1.msra.mxu0 %v62
    %179 = vmatprep.subr.mxu0 0.0
    %180 = vmatpush1.msra.mxu0 0.0
    %181 = vmatprep.subr.mxu0 0.0
    %182 = vmatpush1.msra.mxu0 0.0
    %183 = vmatprep.subr.mxu0 0.0
    %184 = vmatpush1.msra.mxu0 0.0
    %185 = vmatprep.subr.mxu0 0.0
    %186 = vmatpush1.msra.mxu0 0.0
    %187 = vmatprep.subr.mxu0 0.0
    %188 = vmatpush1.msra.mxu0 0.0
    %189 = vmatprep.subr.mxu0 0.0
    %190 = vmatpush1.msra.mxu0 0.0
    %191 = vmatprep.subr.mxu0 0.0
    %192 = vmatpush1.msra.mxu0 0.0
    %193 = vmatprep.subr.mxu0 0.0
    %194 = vmatpush1.msra.mxu0 0.0
    %195 = vmatprep.subr.mxu0 0.0
    %196 = vmatpush1.msra.mxu0 0.0
    %197 = vmatprep.subr.mxu0 0.0
    %198 = vmatpush1.msra.mxu0 0.0
    %199 = vmatprep.subr.mxu0 0.0
    %200 = vmatpush1.msra.mxu0 0.0
    %201 = vmatprep.subr.mxu0 0.0
    %202 = vmatpush1.msra.mxu0 0.0
    %203 = vmatprep.subr.mxu0 0.0
    %204 = vmatpush1.msra.mxu0 0.0
    %205 = vmatprep.subr.mxu0 0.0
    %206 = vmatpush1.msra.mxu0 0.0
    %207 = vmatprep.subr.mxu0 0.0
    %208 = vmatpush1.msra.mxu0 0.0
    %209 = vmatprep.subr.mxu0 0.0
    %210 = vmatpush1.msra.mxu0 0.0
    %211 = vmatprep.subr.mxu0 0.0
    %212 = vmatpush1.msra.mxu0 0.0
    %213 = vmatprep.subr.mxu0 0.0
    %214 = vmatpush1.msra.mxu0 0.0
    %215 = vmatprep.subr.mxu0 0.0
    %216 = vmatpush1.msra.mxu0 0.0
    %217 = vmatprep.subr.mxu0 0.0
    %218 = vmatpush1.msra.mxu0 0.0
    %219 = vmatprep.subr.mxu0 0.0
    %220 = vmatpush1.msra.mxu0 0.0
    %221 = vmatprep.subr.mxu0 0.0
    %222 = vmatpush1.msra.mxu0 0.0
    %223 = vmatprep.subr.mxu0 0.0
    %224 = vmatpush1.msra.mxu0 0.0
    %225 = vmatprep.subr.mxu0 0.0
    %226 = vmatpush1.msra.mxu0 0.0
    %227 = vmatprep.subr.mxu0 0.0
    %228 = vmatpush1.msra.mxu0 0.0
    %229 = vmatprep.subr.mxu0 0.0
    %230 = vmatpush1.msra.mxu0 0.0
    %231 = vmatprep.subr.mxu0 0.0
    %232 = vmatpush1.msra.mxu0 0.0
    %233 = vmatprep.subr.mxu0 0.0
    %234 = vmatpush1.msra.mxu0 0.0
    %235 = vmatprep.mubr.f32.mxu0 0.0
    %236 = vmatmul.mubr.f32.gmra.mrb[0].mxu0 %v169
    %v237 = vpop.f32.mrb[0].mxu0
    %v238 = vadd.f32 0.0, %v237
    %v239 = vpop.f32.mrb[0].mxu0
    %240 = vdwg.mxu0
    %v241 = vadd.f32 %v159, %v238
    %v242 = vxor.u32 %v241, 2147483648
    %v243 = vmul.f32 %v242, 1.442695
    %v244 = vpow.pop %v243
    %v245 = vadd.f32 %v244, 1.0
    %v246 = vrcp.pop %v245
    %v247 = vmul.f32 1.0, %v246
    %v248 = vtanh.pop %v241
    %250 = vrot.lane.b32.xlu0 %v248, 32
    %v251 = vpop.permute.xlu0 %250
    %v253 = vmul.f32 %v247, %v251
    %v254 = vmul.f32 %v247, 0.0
    %256 = vrot.lane.b32.xlu0 %v254, 96
    %v257 = vpop.permute.xlu0 %256
    %v259 = vadd.f32 %v253, %v257
    %v260 = vtanh.pop %v259
    %262 = vrot.lane.b32.xlu0 %v260, 32
    %v263 = vpop.permute.xlu0 %262
    %v265 = vmul.f32 %v247, %v263
    %267 = vrot.lane.b32.xlu0 %v265, 64
    %v268 = vpop.permute.xlu0 %267
    %vm270 = vcmask 254976
    %271 = vst.msk [vmem:[#allocation2] sm:$0x3] %vm270, %v268
    %v272 = vsel %vm167, %v268, 0
    %274 = vmatprep.subr.mxu0 0.0
    %275 = vmatpush1.msra.mxu0 %v59
    %276 = vmatprep.subr.mxu0 0.0
    %277 = vmatpush1.msra.mxu0 %v60
    %278 = vmatprep.subr.mxu0 0.0
    %279 = vmatpush1.msra.mxu0 %v61
    %280 = vmatprep.subr.mxu0 0.0
    %281 = vmatpush1.msra.mxu0 %v62
    %282 = vmatprep.subr.mxu0 0.0
    %283 = vmatpush1.msra.mxu0 0.0
    %284 = vmatprep.subr.mxu0 0.0
    %285 = vmatpush1.msra.mxu0 0.0
    %286 = vmatprep.subr.mxu0 0.0
    %287 = vmatpush1.msra.mxu0 0.0
    %288 = vmatprep.subr.mxu0 0.0
    %289 = vmatpush1.msra.mxu0 0.0
    %290 = vmatprep.subr.mxu0 0.0
    %291 = vmatpush1.msra.mxu0 0.0
    %292 = vmatprep.subr.mxu0 0.0
    %293 = vmatpush1.msra.mxu0 0.0
    %294 = vmatprep.subr.mxu0 0.0
    %295 = vmatpush1.msra.mxu0 0.0
    %296 = vmatprep.subr.mxu0 0.0
    %297 = vmatpush1.msra.mxu0 0.0
    %298 = vmatprep.subr.mxu0 0.0
    %299 = vmatpush1.msra.mxu0 0.0
    %300 = vmatprep.subr.mxu0 0.0
    %301 = vmatpush1.msra.mxu0 0.0
    %302 = vmatprep.subr.mxu0 0.0
    %303 = vmatpush1.msra.mxu0 0.0
    %304 = vmatprep.subr.mxu0 0.0
    %305 = vmatpush1.msra.mxu0 0.0
    %306 = vmatprep.subr.mxu0 0.0
    %307 = vmatpush1.msra.mxu0 0.0
    %308 = vmatprep.subr.mxu0 0.0
    %309 = vmatpush1.msra.mxu0 0.0
    %310 = vmatprep.subr.mxu0 0.0
    %311 = vmatpush1.msra.mxu0 0.0
    %312 = vmatprep.subr.mxu0 0.0
    %313 = vmatpush1.msra.mxu0 0.0
    %314 = vmatprep.subr.mxu0 0.0
    %315 = vmatpush1.msra.mxu0 0.0
    %316 = vmatprep.subr.mxu0 0.0
    %317 = vmatpush1.msra.mxu0 0.0
    %318 = vmatprep.subr.mxu0 0.0
    %319 = vmatpush1.msra.mxu0 0.0
    %320 = vmatprep.subr.mxu0 0.0
    %321 = vmatpush1.msra.mxu0 0.0
    %322 = vmatprep.subr.mxu0 0.0
    %323 = vmatpush1.msra.mxu0 0.0
    %324 = vmatprep.subr.mxu0 0.0
    %325 = vmatpush1.msra.mxu0 0.0
    %326 = vmatprep.subr.mxu0 0.0
    %327 = vmatpush1.msra.mxu0 0.0
    %328 = vmatprep.subr.mxu0 0.0
    %329 = vmatpush1.msra.mxu0 0.0
    %330 = vmatprep.subr.mxu0 0.0
    %331 = vmatpush1.msra.mxu0 0.0
    %332 = vmatprep.subr.mxu0 0.0
    %333 = vmatpush1.msra.mxu0 0.0
    %334 = vmatprep.subr.mxu0 0.0
    %335 = vmatpush1.msra.mxu0 0.0
    %336 = vmatprep.subr.mxu0 0.0
    %337 = vmatpush1.msra.mxu0 0.0
    %338 = vmatprep.mubr.f32.mxu0 0.0
    %339 = vmatmul.mubr.f32.gmra.mrb[0].mxu0 %v272
    %v340 = vpop.f32.mrb[0].mxu0
    %v341 = vadd.f32 0.0, %v340
    %v342 = vpop.f32.mrb[0].mxu0
    %343 = vdwg.mxu0
    %v345 = vrot.slane %v341, 6
    %v347 = vadd.f32 %v159, %v345
    %v348 = vxor.u32 %v347, 2147483648
    %v349 = vmul.f32 %v348, 1.442695
    %v350 = vpow.pop %v349
    %v351 = vadd.f32 %v350, 1.0
    %v352 = vrcp.pop %v351
    %v353 = vmul.f32 1.0, %v352
    %v354 = vtanh.pop %v347
    %356 = vrot.lane.b32.xlu0 %v354, 32
    %v357 = vpop.permute.xlu0 %356
    %v359 = vmul.f32 %v353, %v357
    %v361 = vrot.slane %v259, 6
    %362 = vrot.lane.b32.xlu0 %v361, 32
    %v363 = vpop.permute.xlu0 %362
    %v365 = vmul.f32 %v353, %v363
    %367 = vrot.lane.b32.xlu0 %v365, 96
    %v368 = vpop.permute.xlu0 %367
    %v370 = vadd.f32 %v359, %v368
    %v371 = vtanh.pop %v370
    %373 = vrot.lane.b32.xlu0 %v371, 32
    %v374 = vpop.permute.xlu0 %373
    %v376 = vmul.f32 %v353, %v374
    %378 = vrot.lane.b32.xlu0 %v376, 64
    %v379 = vpop.permute.xlu0 %378
    %vm381 = vcmask 257026
    %382 = vst.msk [vmem:[#allocation2] sm:$0xc] %vm381, %v379
    %v383 = vrot.slane %v376, 2
    %384 = vrot.lane.b32.xlu0 %v383, 64
    %v385 = vpop.permute.xlu0 %384
    %v386 = vsel %vm167, %v385, 0
    %388 = vmatprep.subr.mxu0 0.0
    %389 = vmatpush1.msra.mxu0 %v59
    %390 = vmatprep.subr.mxu0 0.0
    %391 = vmatpush1.msra.mxu0 %v60
    %392 = vmatprep.subr.mxu0 0.0
    %393 = vmatpush1.msra.mxu0 %v61
    %394 = vmatprep.subr.mxu0 0.0
    %395 = vmatpush1.msra.mxu0 %v62
    %396 = vmatprep.subr.mxu0 0.0
    %397 = vmatpush1.msra.mxu0 0.0
    %398 = vmatprep.subr.mxu0 0.0
    %399 = vmatpush1.msra.mxu0 0.0
    %400 = vmatprep.subr.mxu0 0.0
    %401 = vmatpush1.msra.mxu0 0.0
    %402 = vmatprep.subr.mxu0 0.0
    %403 = vmatpush1.msra.mxu0 0.0
    %404 = vmatprep.subr.mxu0 0.0
    %405 = vmatpush1.msra.mxu0 0.0
    %406 = vmatprep.subr.mxu0 0.0
    %407 = vmatpush1.msra.mxu0 0.0
    %408 = vmatprep.subr.mxu0 0.0
    %409 = vmatpush1.msra.mxu0 0.0
    %410 = vmatprep.subr.mxu0 0.0
    %411 = vmatpush1.msra.mxu0 0.0
    %412 = vmatprep.subr.mxu0 0.0
    %413 = vmatpush1.msra.mxu0 0.0
    %414 = vmatprep.subr.mxu0 0.0
    %415 = vmatpush1.msra.mxu0 0.0
    %416 = vmatprep.subr.mxu0 0.0
    %417 = vmatpush1.msra.mxu0 0.0
    %418 = vmatprep.subr.mxu0 0.0
    %419 = vmatpush1.msra.mxu0 0.0
    %420 = vmatprep.subr.mxu0 0.0
    %421 = vmatpush1.msra.mxu0 0.0
    %422 = vmatprep.subr.mxu0 0.0
    %423 = vmatpush1.msra.mxu0 0.0
    %424 = vmatprep.subr.mxu0 0.0
    %425 = vmatpush1.msra.mxu0 0.0
    %426 = vmatprep.subr.mxu0 0.0
    %427 = vmatpush1.msra.mxu0 0.0
    %428 = vmatprep.subr.mxu0 0.0
    %429 = vmatpush1.msra.mxu0 0.0
    %430 = vmatprep.subr.mxu0 0.0
    %431 = vmatpush1.msra.mxu0 0.0
    %432 = vmatprep.subr.mxu0 0.0
    %433 = vmatpush1.msra.mxu0 0.0
    %434 = vmatprep.subr.mxu0 0.0
    %435 = vmatpush1.msra.mxu0 0.0
    %436 = vmatprep.subr.mxu0 0.0
    %437 = vmatpush1.msra.mxu0 0.0
    %438 = vmatprep.subr.mxu0 0.0
    %439 = vmatpush1.msra.mxu0 0.0
    %440 = vmatprep.subr.mxu0 0.0
    %441 = vmatpush1.msra.mxu0 0.0
    %442 = vmatprep.subr.mxu0 0.0
    %443 = vmatpush1.msra.mxu0 0.0
    %444 = vmatprep.subr.mxu0 0.0
    %445 = vmatpush1.msra.mxu0 0.0
    %446 = vmatprep.subr.mxu0 0.0
    %447 = vmatpush1.msra.mxu0 0.0
    %448 = vmatprep.subr.mxu0 0.0
    %449 = vmatpush1.msra.mxu0 0.0
    %450 = vmatprep.subr.mxu0 0.0
    %451 = vmatpush1.msra.mxu0 0.0
    %452 = vmatprep.mubr.f32.mxu0 0.0
    %453 = vmatmul.mubr.f32.gmra.mrb[0].mxu0 %v386
    %v454 = vpop.f32.mrb[0].mxu0
    %v455 = vadd.f32 0.0, %v454
    %v456 = vpop.f32.mrb[0].mxu0
    %457 = vdwg.mxu0
    %v459 = vrot.slane %v455, 4
    %v461 = vadd.f32 %v159, %v459
    %v462 = vxor.u32 %v461, 2147483648
    %v463 = vmul.f32 %v462, 1.442695
    %v464 = vpow.pop %v463
    %v465 = vadd.f32 %v464, 1.0
    %v466 = vrcp.pop %v465
    %v467 = vmul.f32 1.0, %v466
    %v468 = vtanh.pop %v461
    %470 = vrot.lane.b32.xlu0 %v468, 32
    %v471 = vpop.permute.xlu0 %470
    %v473 = vmul.f32 %v467, %v471
    %v475 = vrot.slane %v370, 6
    %476 = vrot.lane.b32.xlu0 %v475, 32
    %v477 = vpop.permute.xlu0 %476
    %v479 = vmul.f32 %v467, %v477
    %481 = vrot.lane.b32.xlu0 %v479, 96
    %v482 = vpop.permute.xlu0 %481
    %v484 = vadd.f32 %v473, %v482
    %v485 = vtanh.pop %v484
    %487 = vrot.lane.b32.xlu0 %v485, 32
    %v488 = vpop.permute.xlu0 %487
    %v490 = vmul.f32 %v467, %v488
    %492 = vrot.lane.b32.xlu0 %v490, 64
    %v493 = vpop.permute.xlu0 %492
    %vm495 = vcmask 259076
    %496 = vst.msk [vmem:[#allocation2] sm:$0x30] %vm495, %v493
    %v497 = vrot.slane %v490, 4
    %498 = vrot.lane.b32.xlu0 %v497, 64
    %v499 = vpop.permute.xlu0 %498
    %v500 = vsel %vm167, %v499, 0
    %502 = vmatprep.subr.mxu0 0.0
    %503 = vmatpush1.msra.mxu0 %v59
    %504 = vmatprep.subr.mxu0 0.0
    %505 = vmatpush1.msra.mxu0 %v60
    %506 = vmatprep.subr.mxu0 0.0
    %507 = vmatpush1.msra.mxu0 %v61
    %508 = vmatprep.subr.mxu0 0.0
    %509 = vmatpush1.msra.mxu0 %v62
    %510 = vmatprep.subr.mxu0 0.0
    %511 = vmatpush1.msra.mxu0 0.0
    %512 = vmatprep.subr.mxu0 0.0
    %513 = vmatpush1.msra.mxu0 0.0
    %514 = vmatprep.subr.mxu0 0.0
    %515 = vmatpush1.msra.mxu0 0.0
    %516 = vmatprep.subr.mxu0 0.0
    %517 = vmatpush1.msra.mxu0 0.0
    %518 = vmatprep.subr.mxu0 0.0
    %519 = vmatpush1.msra.mxu0 0.0
    %520 = vmatprep.subr.mxu0 0.0
    %521 = vmatpush1.msra.mxu0 0.0
    %522 = vmatprep.subr.mxu0 0.0
    %523 = vmatpush1.msra.mxu0 0.0
    %524 = vmatprep.subr.mxu0 0.0
    %525 = vmatpush1.msra.mxu0 0.0
    %526 = vmatprep.subr.mxu0 0.0
    %527 = vmatpush1.msra.mxu0 0.0
    %528 = vmatprep.subr.mxu0 0.0
    %529 = vmatpush1.msra.mxu0 0.0
    %530 = vmatprep.subr.mxu0 0.0
    %531 = vmatpush1.msra.mxu0 0.0
    %532 = vmatprep.subr.mxu0 0.0
    %533 = vmatpush1.msra.mxu0 0.0
    %534 = vmatprep.subr.mxu0 0.0
    %535 = vmatpush1.msra.mxu0 0.0
    %536 = vmatprep.subr.mxu0 0.0
    %537 = vmatpush1.msra.mxu0 0.0
    %538 = vmatprep.subr.mxu0 0.0
    %539 = vmatpush1.msra.mxu0 0.0
    %540 = vmatprep.subr.mxu0 0.0
    %541 = vmatpush1.msra.mxu0 0.0
    %542 = vmatprep.subr.mxu0 0.0
    %543 = vmatpush1.msra.mxu0 0.0
    %544 = vmatprep.subr.mxu0 0.0
    %545 = vmatpush1.msra.mxu0 0.0
    %546 = vmatprep.subr.mxu0 0.0
    %547 = vmatpush1.msra.mxu0 0.0
    %548 = vmatprep.subr.mxu0 0.0
    %549 = vmatpush1.msra.mxu0 0.0
    %550 = vmatprep.subr.mxu0 0.0
    %551 = vmatpush1.msra.mxu0 0.0
    %552 = vmatprep.subr.mxu0 0.0
    %553 = vmatpush1.msra.mxu0 0.0
    %554 = vmatprep.subr.mxu0 0.0
    %555 = vmatpush1.msra.mxu0 0.0
    %556 = vmatprep.subr.mxu0 0.0
    %557 = vmatpush1.msra.mxu0 0.0
    %558 = vmatprep.subr.mxu0 0.0
    %559 = vmatpush1.msra.mxu0 0.0
    %560 = vmatprep.subr.mxu0 0.0
    %561 = vmatpush1.msra.mxu0 0.0
    %562 = vmatprep.subr.mxu0 0.0
    %563 = vmatpush1.msra.mxu0 0.0
    %564 = vmatprep.subr.mxu0 0.0
    %565 = vmatpush1.msra.mxu0 0.0
    %566 = vmatprep.mubr.f32.mxu0 0.0
    %567 = vmatmul.mubr.f32.gmra.mrb[0].mxu0 %v500
    %v568 = vpop.f32.mrb[0].mxu0
    %v569 = vadd.f32 0.0, %v568
    %v570 = vpop.f32.mrb[0].mxu0
    %571 = vdwg.mxu0
    %v573 = vrot.slane %v569, 2
    %v575 = vadd.f32 %v159, %v573
    %v576 = vxor.u32 %v575, 2147483648
    %v577 = vmul.f32 %v576, 1.442695
    %v578 = vpow.pop %v577
    %v579 = vadd.f32 %v578, 1.0
    %v580 = vrcp.pop %v579
    %v581 = vmul.f32 1.0, %v580
    %v582 = vtanh.pop %v575
    %584 = vrot.lane.b32.xlu0 %v582, 32
    %v585 = vpop.permute.xlu0 %584
    %v587 = vmul.f32 %v581, %v585
    %v589 = vrot.slane %v484, 6
    %590 = vrot.lane.b32.xlu0 %v589, 32
    %v591 = vpop.permute.xlu0 %590
    %v593 = vmul.f32 %v581, %v591
    %595 = vrot.lane.b32.xlu0 %v593, 96
    %v596 = vpop.permute.xlu0 %595
    %v598 = vadd.f32 %v587, %v596
    %v599 = vtanh.pop %v598
    %601 = vrot.lane.b32.xlu0 %v599, 32
    %v602 = vpop.permute.xlu0 %601
    %v604 = vmul.f32 %v581, %v602
    %606 = vrot.lane.b32.xlu0 %v604, 64
    %v607 = vpop.permute.xlu0 %606
    %vm609 = vcmask 261126
    %610 = vst.msk [vmem:[#allocation2] sm:$0xc0] %vm609, %v607
    %v611 = vrot.slane %v604, 6
    %612 = vrot.lane.b32.xlu0 %v611, 64
    %v613 = vpop.permute.xlu0 %612
    %v614 = vsel %vm167, %v613, 0
    %616 = vmatprep.subr.mxu0 0.0
    %617 = vmatpush1.msra.mxu0 %v59
    %618 = vmatprep.subr.mxu0 0.0
    %619 = vmatpush1.msra.mxu0 %v60
    %620 = vmatprep.subr.mxu0 0.0
    %621 = vmatpush1.msra.mxu0 %v61
    %622 = vmatprep.subr.mxu0 0.0
    %623 = vmatpush1.msra.mxu0 %v62
    %624 = vmatprep.subr.mxu0 0.0
    %625 = vmatpush1.msra.mxu0 0.0
    %626 = vmatprep.subr.mxu0 0.0
    %627 = vmatpush1.msra.mxu0 0.0
    %628 = vmatprep.subr.mxu0 0.0
    %629 = vmatpush1.msra.mxu0 0.0
    %630 = vmatprep.subr.mxu0 0.0
    %631 = vmatpush1.msra.mxu0 0.0
    %632 = vmatprep.subr.mxu0 0.0
    %633 = vmatpush1.msra.mxu0 0.0
    %634 = vmatprep.subr.mxu0 0.0
    %635 = vmatpush1.msra.mxu0 0.0
    %636 = vmatprep.subr.mxu0 0.0
    %637 = vmatpush1.msra.mxu0 0.0
    %638 = vmatprep.subr.mxu0 0.0
    %639 = vmatpush1.msra.mxu0 0.0
    %640 = vmatprep.subr.mxu0 0.0
    %641 = vmatpush1.msra.mxu0 0.0
    %642 = vmatprep.subr.mxu0 0.0
    %643 = vmatpush1.msra.mxu0 0.0
    %644 = vmatprep.subr.mxu0 0.0
    %645 = vmatpush1.msra.mxu0 0.0
    %646 = vmatprep.subr.mxu0 0.0
    %647 = vmatpush1.msra.mxu0 0.0
    %648 = vmatprep.subr.mxu0 0.0
    %649 = vmatpush1.msra.mxu0 0.0
    %650 = vmatprep.subr.mxu0 0.0
    %651 = vmatpush1.msra.mxu0 0.0
    %652 = vmatprep.subr.mxu0 0.0
    %653 = vmatpush1.msra.mxu0 0.0
    %654 = vmatprep.subr.mxu0 0.0
    %655 = vmatpush1.msra.mxu0 0.0
    %656 = vmatprep.subr.mxu0 0.0
    %657 = vmatpush1.msra.mxu0 0.0
    %658 = vmatprep.subr.mxu0 0.0
    %659 = vmatpush1.msra.mxu0 0.0
    %660 = vmatprep.subr.mxu0 0.0
    %661 = vmatpush1.msra.mxu0 0.0
    %662 = vmatprep.subr.mxu0 0.0
    %663 = vmatpush1.msra.mxu0 0.0
    %664 = vmatprep.subr.mxu0 0.0
    %665 = vmatpush1.msra.mxu0 0.0
    %666 = vmatprep.subr.mxu0 0.0
    %667 = vmatpush1.msra.mxu0 0.0
    %668 = vmatprep.subr.mxu0 0.0
    %669 = vmatpush1.msra.mxu0 0.0
    %670 = vmatprep.subr.mxu0 0.0
    %671 = vmatpush1.msra.mxu0 0.0
    %672 = vmatprep.subr.mxu0 0.0
    %673 = vmatpush1.msra.mxu0 0.0
    %674 = vmatprep.subr.mxu0 0.0
    %675 = vmatpush1.msra.mxu0 0.0
    %676 = vmatprep.subr.mxu0 0.0
    %677 = vmatpush1.msra.mxu0 0.0
    %678 = vmatprep.subr.mxu0 0.0
    %679 = vmatpush1.msra.mxu0 0.0
    %680 = vmatprep.mubr.f32.mxu0 0.0
    %681 = vmatmul.mubr.f32.gmra.mrb[0].mxu0 %v614
    %v682 = vpop.f32.mrb[0].mxu0
    %v683 = vadd.f32 0.0, %v682
    %v684 = vpop.f32.mrb[0].mxu0
    %685 = vdwg.mxu0
    %v686 = vadd.f32 %v164, %v683
    %v687 = vxor.u32 %v686, 2147483648
    %v688 = vmul.f32 %v687, 1.442695
    %v689 = vpow.pop %v688
    %v690 = vadd.f32 %v689, 1.0
    %v691 = vrcp.pop %v690
    %v692 = vmul.f32 1.0, %v691
    %v693 = vtanh.pop %v686
    %695 = vrot.lane.b32.xlu0 %v693, 32
    %v696 = vpop.permute.xlu0 %695
    %v698 = vmul.f32 %v692, %v696
    %v700 = vrot.slane %v598, 6
    %701 = vrot.lane.b32.xlu0 %v700, 32
    %v702 = vpop.permute.xlu0 %701
    %v704 = vmul.f32 %v692, %v702
    %706 = vrot.lane.b32.xlu0 %v704, 96
    %v707 = vpop.permute.xlu0 %706
    %v709 = vadd.f32 %v698, %v707
    %v710 = vtanh.pop %v709
    %712 = vrot.lane.b32.xlu0 %v710, 32
    %v713 = vpop.permute.xlu0 %712
    %v715 = vmul.f32 %v692, %v713
    %717 = vrot.lane.b32.xlu0 %v715, 64
    %v718 = vpop.permute.xlu0 %717
    %720 = vst.msk [vmem:[#allocation2 + $0x8] sm:$0x3] %vm270, %v718
    %v721 = vsel %vm167, %v718, 0
    %723 = vmatprep.subr.mxu0 0.0
    %724 = vmatpush1.msra.mxu0 %v59
    %725 = vmatprep.subr.mxu0 0.0
    %726 = vmatpush1.msra.mxu0 %v60
    %727 = vmatprep.subr.mxu0 0.0
    %728 = vmatpush1.msra.mxu0 %v61
    %729 = vmatprep.subr.mxu0 0.0
    %730 = vmatpush1.msra.mxu0 %v62
    %731 = vmatprep.subr.mxu0 0.0
    %732 = vmatpush1.msra.mxu0 0.0
    %733 = vmatprep.subr.mxu0 0.0
    %734 = vmatpush1.msra.mxu0 0.0
    %735 = vmatprep.subr.mxu0 0.0
    %736 = vmatpush1.msra.mxu0 0.0
    %737 = vmatprep.subr.mxu0 0.0
    %738 = vmatpush1.msra.mxu0 0.0
    %739 = vmatprep.subr.mxu0 0.0
    %740 = vmatpush1.msra.mxu0 0.0
    %741 = vmatprep.subr.mxu0 0.0
    %742 = vmatpush1.msra.mxu0 0.0
    %743 = vmatprep.subr.mxu0 0.0
    %744 = vmatpush1.msra.mxu0 0.0
    %745 = vmatprep.subr.mxu0 0.0
    %746 = vmatpush1.msra.mxu0 0.0
    %747 = vmatprep.subr.mxu0 0.0
    %748 = vmatpush1.msra.mxu0 0.0
    %749 = vmatprep.subr.mxu0 0.0
    %750 = vmatpush1.msra.mxu0 0.0
    %751 = vmatprep.subr.mxu0 0.0
    %752 = vmatpush1.msra.mxu0 0.0
    %753 = vmatprep.subr.mxu0 0.0
    %754 = vmatpush1.msra.mxu0 0.0
    %755 = vmatprep.subr.mxu0 0.0
    %756 = vmatpush1.msra.mxu0 0.0
    %757 = vmatprep.subr.mxu0 0.0
    %758 = vmatpush1.msra.mxu0 0.0
    %759 = vmatprep.subr.mxu0 0.0
    %760 = vmatpush1.msra.mxu0 0.0
    %761 = vmatprep.subr.mxu0 0.0
    %762 = vmatpush1.msra.mxu0 0.0
    %763 = vmatprep.subr.mxu0 0.0
    %764 = vmatpush1.msra.mxu0 0.0
    %765 = vmatprep.subr.mxu0 0.0
    %766 = vmatpush1.msra.mxu0 0.0
    %767 = vmatprep.subr.mxu0 0.0
    %768 = vmatpush1.msra.mxu0 0.0
    %769 = vmatprep.subr.mxu0 0.0
    %770 = vmatpush1.msra.mxu0 0.0
    %771 = vmatprep.subr.mxu0 0.0
    %772 = vmatpush1.msra.mxu0 0.0
    %773 = vmatprep.subr.mxu0 0.0
    %774 = vmatpush1.msra.mxu0 0.0
    %775 = vmatprep.subr.mxu0 0.0
    %776 = vmatpush1.msra.mxu0 0.0
    %777 = vmatprep.subr.mxu0 0.0
    %778 = vmatpush1.msra.mxu0 0.0
    %779 = vmatprep.subr.mxu0 0.0
    %780 = vmatpush1.msra.mxu0 0.0
    %781 = vmatprep.subr.mxu0 0.0
    %782 = vmatpush1.msra.mxu0 0.0
    %783 = vmatprep.subr.mxu0 0.0
    %784 = vmatpush1.msra.mxu0 0.0
    %785 = vmatprep.subr.mxu0 0.0
    %786 = vmatpush1.msra.mxu0 0.0
    %787 = vmatprep.mubr.f32.mxu0 0.0
    %788 = vmatmul.mubr.f32.gmra.mrb[0].mxu0 %v721
    %v789 = vpop.f32.mrb[0].mxu0
    %v790 = vadd.f32 0.0, %v789
    %v791 = vpop.f32.mrb[0].mxu0
    %792 = vdwg.mxu0
    %v794 = vrot.slane %v790, 6
    %v796 = vadd.f32 %v164, %v794
    %v797 = vxor.u32 %v796, 2147483648
    %v798 = vmul.f32 %v797, 1.442695
    %v799 = vpow.pop %v798
    %v800 = vadd.f32 %v799, 1.0
    %v801 = vrcp.pop %v800
    %v802 = vmul.f32 1.0, %v801
    %v803 = vtanh.pop %v796
    %805 = vrot.lane.b32.xlu0 %v803, 32
    %v806 = vpop.permute.xlu0 %805
    %v808 = vmul.f32 %v802, %v806
    %v810 = vrot.slane %v709, 6
    %811 = vrot.lane.b32.xlu0 %v810, 32
    %v812 = vpop.permute.xlu0 %811
    %v814 = vmul.f32 %v802, %v812
    %816 = vrot.lane.b32.xlu0 %v814, 96
    %v817 = vpop.permute.xlu0 %816
    %v819 = vadd.f32 %v808, %v817
    %v820 = vtanh.pop %v819
    %822 = vrot.lane.b32.xlu0 %v820, 32
    %v823 = vpop.permute.xlu0 %822
    %v825 = vmul.f32 %v802, %v823
    %827 = vrot.lane.b32.xlu0 %v825, 64
    %v828 = vpop.permute.xlu0 %827
    %830 = vst.msk [vmem:[#allocation2 + $0x8] sm:$0xc] %vm381, %v828
    %v831 = vrot.slane %v825, 2
    %832 = vrot.lane.b32.xlu0 %v831, 64
    %v833 = vpop.permute.xlu0 %832
    %v834 = vsel %vm167, %v833, 0
    %836 = vmatprep.subr.mxu0 0.0
    %837 = vmatpush1.msra.mxu0 %v59
    %838 = vmatprep.subr.mxu0 0.0
    %839 = vmatpush1.msra.mxu0 %v60
    %840 = vmatprep.subr.mxu0 0.0
    %841 = vmatpush1.msra.mxu0 %v61
    %842 = vmatprep.subr.mxu0 0.0
    %843 = vmatpush1.msra.mxu0 %v62
    %844 = vmatprep.subr.mxu0 0.0
    %845 = vmatpush1.msra.mxu0 0.0
    %846 = vmatprep.subr.mxu0 0.0
    %847 = vmatpush1.msra.mxu0 0.0
    %848 = vmatprep.subr.mxu0 0.0
    %849 = vmatpush1.msra.mxu0 0.0
    %850 = vmatprep.subr.mxu0 0.0
    %851 = vmatpush1.msra.mxu0 0.0
    %852 = vmatprep.subr.mxu0 0.0
    %853 = vmatpush1.msra.mxu0 0.0
    %854 = vmatprep.subr.mxu0 0.0
    %855 = vmatpush1.msra.mxu0 0.0
    %856 = vmatprep.subr.mxu0 0.0
    %857 = vmatpush1.msra.mxu0 0.0
    %858 = vmatprep.subr.mxu0 0.0
    %859 = vmatpush1.msra.mxu0 0.0
    %860 = vmatprep.subr.mxu0 0.0
    %861 = vmatpush1.msra.mxu0 0.0
    %862 = vmatprep.subr.mxu0 0.0
    %863 = vmatpush1.msra.mxu0 0.0
    %864 = vmatprep.subr.mxu0 0.0
    %865 = vmatpush1.msra.mxu0 0.0
    %866 = vmatprep.subr.mxu0 0.0
    %867 = vmatpush1.msra.mxu0 0.0
    %868 = vmatprep.subr.mxu0 0.0
    %869 = vmatpush1.msra.mxu0 0.0
    %870 = vmatprep.subr.mxu0 0.0
    %871 = vmatpush1.msra.mxu0 0.0
    %872 = vmatprep.subr.mxu0 0.0
    %873 = vmatpush1.msra.mxu0 0.0
    %874 = vmatprep.subr.mxu0 0.0
    %875 = vmatpush1.msra.mxu0 0.0
    %876 = vmatprep.subr.mxu0 0.0
    %877 = vmatpush1.msra.mxu0 0.0
    %878 = vmatprep.subr.mxu0 0.0
    %879 = vmatpush1.msra.mxu0 0.0
    %880 = vmatprep.subr.mxu0 0.0
    %881 = vmatpush1.msra.mxu0 0.0
    %882 = vmatprep.subr.mxu0 0.0
    %883 = vmatpush1.msra.mxu0 0.0
    %884 = vmatprep.subr.mxu0 0.0
    %885 = vmatpush1.msra.mxu0 0.0
    %886 = vmatprep.subr.mxu0 0.0
    %887 = vmatpush1.msra.mxu0 0.0
    %888 = vmatprep.subr.mxu0 0.0
    %889 = vmatpush1.msra.mxu0 0.0
    %890 = vmatprep.subr.mxu0 0.0
    %891 = vmatpush1.msra.mxu0 0.0
    %892 = vmatprep.subr.mxu0 0.0
    %893 = vmatpush1.msra.mxu0 0.0
    %894 = vmatprep.subr.mxu0 0.0
    %895 = vmatpush1.msra.mxu0 0.0
    %896 = vmatprep.subr.mxu0 0.0
    %897 = vmatpush1.msra.mxu0 0.0
    %898 = vmatprep.subr.mxu0 0.0
    %899 = vmatpush1.msra.mxu0 0.0
    %900 = vmatprep.mubr.f32.mxu0 0.0
    %901 = vmatmul.mubr.f32.gmra.mrb[0].mxu0 %v834
    %v902 = vpop.f32.mrb[0].mxu0
    %v903 = vadd.f32 0.0, %v902
    %v904 = vpop.f32.mrb[0].mxu0
    %905 = vdwg.mxu0
    %v907 = vrot.slane %v903, 4
    %v909 = vadd.f32 %v164, %v907
    %v910 = vxor.u32 %v909, 2147483648
    %v911 = vmul.f32 %v910, 1.442695
    %v912 = vpow.pop %v911
    %v913 = vadd.f32 %v912, 1.0
    %v914 = vrcp.pop %v913
    %v915 = vmul.f32 1.0, %v914
    %v916 = vtanh.pop %v909
    %918 = vrot.lane.b32.xlu0 %v916, 32
    %v919 = vpop.permute.xlu0 %918
    %v921 = vmul.f32 %v915, %v919
    %v923 = vrot.slane %v819, 6
    %924 = vrot.lane.b32.xlu0 %v923, 32
    %v925 = vpop.permute.xlu0 %924
    %v927 = vmul.f32 %v915, %v925
    %929 = vrot.lane.b32.xlu0 %v927, 96
    %v930 = vpop.permute.xlu0 %929
    %v932 = vadd.f32 %v921, %v930
    %v933 = vtanh.pop %v932
    %935 = vrot.lane.b32.xlu0 %v933, 32
    %v936 = vpop.permute.xlu0 %935
    %v938 = vmul.f32 %v915, %v936
    %940 = vrot.lane.b32.xlu0 %v938, 64
    %v941 = vpop.permute.xlu0 %940
    %943 = vst.msk [vmem:[#allocation2 + $0x8] sm:$0x30] %vm495, %v941
    %v944 = vrot.slane %v938, 4
    %945 = vrot.lane.b32.xlu0 %v944, 64
    %v946 = vpop.permute.xlu0 %945
    %v947 = vsel %vm167, %v946, 0
    %949 = vmatprep.subr.mxu0 0.0
    %950 = vmatpush1.msra.mxu0 %v59
    %951 = vmatprep.subr.mxu0 0.0
    %952 = vmatpush1.msra.mxu0 %v60
    %953 = vmatprep.subr.mxu0 0.0
    %954 = vmatpush1.msra.mxu0 %v61
    %955 = vmatprep.subr.mxu0 0.0
    %956 = vmatpush1.msra.mxu0 %v62
    %957 = vmatprep.subr.mxu0 0.0
    %958 = vmatpush1.msra.mxu0 0.0
    %959 = vmatprep.subr.mxu0 0.0
    %960 = vmatpush1.msra.mxu0 0.0
    %961 = vmatprep.subr.mxu0 0.0
    %962 = vmatpush1.msra.mxu0 0.0
    %963 = vmatprep.subr.mxu0 0.0
    %964 = vmatpush1.msra.mxu0 0.0
    %965 = vmatprep.subr.mxu0 0.0
    %966 = vmatpush1.msra.mxu0 0.0
    %967 = vmatprep.subr.mxu0 0.0
    %968 = vmatpush1.msra.mxu0 0.0
    %969 = vmatprep.subr.mxu0 0.0
    %970 = vmatpush1.msra.mxu0 0.0
    %971 = vmatprep.subr.mxu0 0.0
    %972 = vmatpush1.msra.mxu0 0.0
    %973 = vmatprep.subr.mxu0 0.0
    %974 = vmatpush1.msra.mxu0 0.0
    %975 = vmatprep.subr.mxu0 0.0
    %976 = vmatpush1.msra.mxu0 0.0
    %977 = vmatprep.subr.mxu0 0.0
    %978 = vmatpush1.msra.mxu0 0.0
    %979 = vmatprep.subr.mxu0 0.0
    %980 = vmatpush1.msra.mxu0 0.0
    %981 = vmatprep.subr.mxu0 0.0
    %982 = vmatpush1.msra.mxu0 0.0
    %983 = vmatprep.subr.mxu0 0.0
    %984 = vmatpush1.msra.mxu0 0.0
    %985 = vmatprep.subr.mxu0 0.0
    %986 = vmatpush1.msra.mxu0 0.0
    %987 = vmatprep.subr.mxu0 0.0
    %988 = vmatpush1.msra.mxu0 0.0
    %989 = vmatprep.subr.mxu0 0.0
    %990 = vmatpush1.msra.mxu0 0.0
    %991 = vmatprep.subr.mxu0 0.0
    %992 = vmatpush1.msra.mxu0 0.0
    %993 = vmatprep.subr.mxu0 0.0
    %994 = vmatpush1.msra.mxu0 0.0
    %995 = vmatprep.subr.mxu0 0.0
    %996 = vmatpush1.msra.mxu0 0.0
    %997 = vmatprep.subr.mxu0 0.0
    %998 = vmatpush1.msra.mxu0 0.0
    %999 = vmatprep.subr.mxu0 0.0
    %1000 = vmatpush1.msra.mxu0 0.0
    %1001 = vmatprep.subr.mxu0 0.0
    %1002 = vmatpush1.msra.mxu0 0.0
    %1003 = vmatprep.subr.mxu0 0.0
    %1004 = vmatpush1.msra.mxu0 0.0
    %1005 = vmatprep.subr.mxu0 0.0
    %1006 = vmatpush1.msra.mxu0 0.0
    %1007 = vmatprep.subr.mxu0 0.0
    %1008 = vmatpush1.msra.mxu0 0.0
    %1009 = vmatprep.subr.mxu0 0.0
    %1010 = vmatpush1.msra.mxu0 0.0
    %1011 = vmatprep.subr.mxu0 0.0
    %1012 = vmatpush1.msra.mxu0 0.0
    %1013 = vmatprep.mubr.f32.mxu0 0.0
    %1014 = vmatmul.mubr.f32.gmra.mrb[0].mxu0 %v947
    %v1015 = vpop.f32.mrb[0].mxu0
    %v1016 = vadd.f32 0.0, %v1015
    %v1017 = vpop.f32.mrb[0].mxu0
    %1018 = vdwg.mxu0
    %v1020 = vrot.slane %v1016, 2
    %v1022 = vadd.f32 %v164, %v1020
    %v1023 = vxor.u32 %v1022, 2147483648
    %v1024 = vmul.f32 %v1023, 1.442695
    %v1025 = vpow.pop %v1024
    %v1026 = vadd.f32 %v1025, 1.0
    %v1027 = vrcp.pop %v1026
    %v1028 = vmul.f32 1.0, %v1027
    %v1029 = vtanh.pop %v1022
    %1031 = vrot.lane.b32.xlu0 %v1029, 32
    %v1032 = vpop.permute.xlu0 %1031
    %v1034 = vmul.f32 %v1028, %v1032
    %v1036 = vrot.slane %v932, 6
    %1037 = vrot.lane.b32.xlu0 %v1036, 32
    %v1038 = vpop.permute.xlu0 %1037
    %v1040 = vmul.f32 %v1028, %v1038
    %1042 = vrot.lane.b32.xlu0 %v1040, 96
    %v1043 = vpop.permute.xlu0 %1042
    %v1045 = vadd.f32 %v1034, %v1043
    %v1046 = vtanh.pop %v1045
    %1048 = vrot.lane.b32.xlu0 %v1046, 32
    %v1049 = vpop.permute.xlu0 %1048
    %v1051 = vmul.f32 %v1028, %v1049
    %1053 = vrot.lane.b32.xlu0 %v1051, 64
    %v1054 = vpop.permute.xlu0 %1053
    %1056 = vst.msk [vmem:[#allocation2 + $0x8] sm:$0xc0] %vm609, %v1054
    %v1057 = vld [vmem:[#allocation2] sm:$0xff]
    %v1058 = vld [vmem:[#allocation2 + $0x8] sm:$0xff]
    %v1060 = vlaneseq
    %v1061 = vshrl.u32 %v1060, 7
    %v1062 = vsub.s32 0, %v1061
    %v1063 = vrot.slane %v68, %v1062
    %v1066 = vsel %vm167, %v1057, 0
    %v1069 = vsel %vm167, %v1058, 0
    %1071 = vmatprep.subr.mxu0 0.0
    %1072 = vmatpush1.msra.mxu0 %v64
    %1073 = vmatprep.subr.mxu0 0.0
    %1074 = vmatpush1.msra.mxu0 %v65
    %1075 = vmatprep.subr.mxu0 0.0
    %1076 = vmatpush1.msra.mxu0 %v66
    %1077 = vmatprep.subr.mxu0 0.0
    %1078 = vmatpush1.msra.mxu0 %v67
    %1079 = vmatprep.subr.mxu0 0.0
    %1080 = vmatpush1.msra.mxu0 0.0
    %1081 = vmatprep.subr.mxu0 0.0
    %1082 = vmatpush1.msra.mxu0 0.0
    %1083 = vmatprep.subr.mxu0 0.0
    %1084 = vmatpush1.msra.mxu0 0.0
    %1085 = vmatprep.subr.mxu0 0.0
    %1086 = vmatpush1.msra.mxu0 0.0
    %1087 = vmatprep.subr.mxu0 0.0
    %1088 = vmatpush1.msra.mxu0 0.0
    %1089 = vmatprep.subr.mxu0 0.0
    %1090 = vmatpush1.msra.mxu0 0.0
    %1091 = vmatprep.subr.mxu0 0.0
    %1092 = vmatpush1.msra.mxu0 0.0
    %1093 = vmatprep.subr.mxu0 0.0
    %1094 = vmatpush1.msra.mxu0 0.0
    %1095 = vmatprep.subr.mxu0 0.0
    %1096 = vmatpush1.msra.mxu0 0.0
    %1097 = vmatprep.subr.mxu0 0.0
    %1098 = vmatpush1.msra.mxu0 0.0
    %1099 = vmatprep.subr.mxu0 0.0
    %1100 = vmatpush1.msra.mxu0 0.0
    %1101 = vmatprep.subr.mxu0 0.0
    %1102 = vmatpush1.msra.mxu0 0.0
    %1103 = vmatprep.subr.mxu0 0.0
    %1104 = vmatpush1.msra.mxu0 0.0
    %1105 = vmatprep.subr.mxu0 0.0
    %1106 = vmatpush1.msra.mxu0 0.0
    %1107 = vmatprep.subr.mxu0 0.0
    %1108 = vmatpush1.msra.mxu0 0.0
    %1109 = vmatprep.subr.mxu0 0.0
    %1110 = vmatpush1.msra.mxu0 0.0
    %1111 = vmatprep.subr.mxu0 0.0
    %1112 = vmatpush1.msra.mxu0 0.0
    %1113 = vmatprep.subr.mxu0 0.0
    %1114 = vmatpush1.msra.mxu0 0.0
    %1115 = vmatprep.subr.mxu0 0.0
    %1116 = vmatpush1.msra.mxu0 0.0
    %1117 = vmatprep.subr.mxu0 0.0
    %1118 = vmatpush1.msra.mxu0 0.0
    %1119 = vmatprep.subr.mxu0 0.0
    %1120 = vmatpush1.msra.mxu0 0.0
    %1121 = vmatprep.subr.mxu0 0.0
    %1122 = vmatpush1.msra.mxu0 0.0
    %1123 = vmatprep.subr.mxu0 0.0
    %1124 = vmatpush1.msra.mxu0 0.0
    %1125 = vmatprep.subr.mxu0 0.0
    %1126 = vmatpush1.msra.mxu0 0.0
    %1127 = vmatprep.subr.mxu0 0.0
    %1128 = vmatpush1.msra.mxu0 0.0
    %1129 = vmatprep.subr.mxu0 0.0
    %1130 = vmatpush1.msra.mxu0 0.0
    %1131 = vmatprep.subr.mxu0 0.0
    %1132 = vmatpush1.msra.mxu0 0.0
    %1133 = vmatprep.subr.mxu0 0.0
    %1134 = vmatpush1.msra.mxu0 0.0
    %1135 = vmatprep.mubr.f32.mxu0 0.0
    %1136 = vmatmul.mubr.f32.gmra.mrb[0].mxu0 %v1066
    %v1137 = vpop.f32.mrb[0].mxu0
    %v1138 = vadd.f32 %v1063, %v1137
    %v1139 = vpop.f32.mrb[0].mxu0
    %1140 = vmatprep.mubr.f32.mxu0 0.0
    %1141 = vmatmul.mubr.f32.gmra.mrb[0].mxu0 %v1069
    %v1142 = vpop.f32.mrb[0].mxu0
    %v1143 = vadd.f32 %v1063, %v1142
    %v1144 = vpop.f32.mrb[0].mxu0
    %1145 = vdwg.mxu0
    %v1146 = vxor.u32 %v1138, 2147483648
    %v1147 = vxor.u32 %v1143, 2147483648
    %v1148 = vmul.f32 %v1146, 1.442695
    %v1149 = vpow.pop %v1148
    %v1150 = vmul.f32 %v1147, 1.442695
    %v1151 = vpow.pop %v1150
    %v1152 = vadd.f32 %v1149, 1.0
    %v1153 = vadd.f32 %v1151, 1.0
    %v1154 = vrcp.pop %v1152
    %v1155 = vmul.f32 1.0, %v1154
    %v1156 = vrcp.pop %v1153
    %v1157 = vmul.f32 1.0, %v1156
    %v1159 = vlaneseq
    %v1160 = vshrl.u32 %v1159, 7
    %v1161 = vsub.s32 0, %v1160
    %v1162 = vrot.slane %v76, %v1161
    %vm1164 = vcmask 408576
    %v1166 = vsel %vm1164, %v1155, 0
    %v1169 = vsel %vm1164, %v1157, 0
    %vm1171 = vcmask 1041408
    %v1173 = vsel %vm1171, %v75, 0
    %1175 = vmatprep.subr.mxu0 0.0
    %1176 = vmatpush1.msra.mxu0 %v69
    %1177 = vmatprep.subr.mxu0 0.0
    %1178 = vmatpush1.msra.mxu0 %v70
    %1179 = vmatprep.subr.mxu0 0.0
    %1180 = vmatpush1.msra.mxu0 %v71
    %1181 = vmatprep.subr.mxu0 0.0
    %1182 = vmatpush1.msra.mxu0 %v72
    %1183 = vmatprep.subr.mxu0 0.0
    %1184 = vmatpush1.msra.mxu0 %v73
    %1185 = vmatprep.subr.mxu0 0.0
    %1186 = vmatpush1.msra.mxu0 %v74
    %1187 = vmatprep.subr.mxu0 0.0
    %1188 = vmatpush1.msra.mxu0 %v1173
    %1189 = vmatprep.subr.mxu0 0.0
    %1190 = vmatpush1.msra.mxu0 0.0
    %1191 = vmatprep.subr.mxu0 0.0
    %1192 = vmatpush1.msra.mxu0 0.0
    %1193 = vmatprep.subr.mxu0 0.0
    %1194 = vmatpush1.msra.mxu0 0.0
    %1195 = vmatprep.subr.mxu0 0.0
    %1196 = vmatpush1.msra.mxu0 0.0
    %1197 = vmatprep.subr.mxu0 0.0
    %1198 = vmatpush1.msra.mxu0 0.0
    %1199 = vmatprep.subr.mxu0 0.0
    %1200 = vmatpush1.msra.mxu0 0.0
    %1201 = vmatprep.subr.mxu0 0.0
    %1202 = vmatpush1.msra.mxu0 0.0
    %1203 = vmatprep.subr.mxu0 0.0
    %1204 = vmatpush1.msra.mxu0 0.0
    %1205 = vmatprep.subr.mxu0 0.0
    %1206 = vmatpush1.msra.mxu0 0.0
    %1207 = vmatprep.subr.mxu0 0.0
    %1208 = vmatpush1.msra.mxu0 0.0
    %1209 = vmatprep.subr.mxu0 0.0
    %1210 = vmatpush1.msra.mxu0 0.0
    %1211 = vmatprep.subr.mxu0 0.0
    %1212 = vmatpush1.msra.mxu0 0.0
    %1213 = vmatprep.subr.mxu0 0.0
    %1214 = vmatpush1.msra.mxu0 0.0
    %1215 = vmatprep.subr.mxu0 0.0
    %1216 = vmatpush1.msra.mxu0 0.0
    %1217 = vmatprep.subr.mxu0 0.0
    %1218 = vmatpush1.msra.mxu0 0.0
    %1219 = vmatprep.subr.mxu0 0.0
    %1220 = vmatpush1.msra.mxu0 0.0
    %1221 = vmatprep.subr.mxu0 0.0
    %1222 = vmatpush1.msra.mxu0 0.0
    %1223 = vmatprep.subr.mxu0 0.0
    %1224 = vmatpush1.msra.mxu0 0.0
    %1225 = vmatprep.subr.mxu0 0.0
    %1226 = vmatpush1.msra.mxu0 0.0
    %1227 = vmatprep.subr.mxu0 0.0
    %1228 = vmatpush1.msra.mxu0 0.0
    %1229 = vmatprep.subr.mxu0 0.0
    %1230 = vmatpush1.msra.mxu0 0.0
    %1231 = vmatprep.subr.mxu0 0.0
    %1232 = vmatpush1.msra.mxu0 0.0
    %1233 = vmatprep.subr.mxu0 0.0
    %1234 = vmatpush1.msra.mxu0 0.0
    %1235 = vmatprep.subr.mxu0 0.0
    %1236 = vmatpush1.msra.mxu0 0.0
    %1237 = vmatprep.subr.mxu0 0.0
    %1238 = vmatpush1.msra.mxu0 0.0
    %1239 = vmatprep.mubr.f32.mxu0 0.0
    %1240 = vmatmul.mubr.f32.gmra.mrb[0].mxu0 %v1166
    %v1241 = vpop.f32.mrb[0].mxu0
    %v1242 = vadd.f32 %v1162, %v1241
    %v1243 = vpop.f32.mrb[0].mxu0
    %1244 = vmatprep.mubr.f32.mxu0 0.0
    %1245 = vmatmul.mubr.f32.gmra.mrb[0].mxu0 %v1169
    %v1246 = vpop.f32.mrb[0].mxu0
    %v1247 = vadd.f32 %v1162, %v1246
    %v1248 = vpop.f32.mrb[0].mxu0
    %1249 = vdwg.mxu0
    %vm1250 = vcmask 31744
    %1251 = vst.msk [vmem:[%s8] sm:$0xff] %vm1250, %v1242
    %1252 = vst.msk [vmem:[%s8 + $0x8] sm:$0xff] %vm1250, %v1247
    // Predicated region
    $region42: #{tpu_custom_call.1} parent=1 // pred_check
      _
    $region43: #{tpu_custom_call.1} parent=1 // pred_check_branch
      %1254 = sbr.rel (0) target = $region45
    $region44: #{tpu_custom_call.1} parent=1 // pred_region
      _
    $region45: #{tpu_custom_call.1} parent=1 // pred_fallthru
      _
    // Predicated region
    $region46: #{tpu_custom_call.1} parent=1 // pred_check
      _
    $region47: #{tpu_custom_call.1} parent=1 // pred_check_branch
      %1256 = sbr.rel (0) target = $region49
    $region48: #{tpu_custom_call.1} parent=1 // pred_region
      _
    $region49: #{tpu_custom_call.1} parent=1 // pred_fallthru
      _
    %1257 = vsyncpa [#allocation4], 1
    %1258 = vsyncpa [#allocation6], 1

</llo_original>
